<compile_context>
chip_gen: v7x
topology: tpu7x:2x2x1
jax: 0.10.0
libtpu: 0.0.40
codegen_flags: <defaults>
</compile_context>

<pallas_src>
import functools

import jax
import jax.numpy as jnp
import numpy as np
from jax.experimental import pallas as pl
from jax.experimental.pallas import tpu as pltpu

_NEG_BIG = -1e30
_LANE = 128


def _round_up(v, m):
    return (v + m - 1) // m * m


def _layernorm_rows(h, gamma, beta, eps=1e-5):
    # LayerNorm over the last (lane) axis; gamma/beta are [1, F]; f32 math.
    mu = jnp.mean(h, axis=-1, keepdims=True)
    var = jnp.mean((h - mu) ** 2, axis=-1, keepdims=True)
    return (h - mu) * jax.lax.rsqrt(var + eps) * gamma + beta


# ---------------------------------------------------------------------------------------
# Kernel 1: gate MLP + online segment-softmax pooling over streaming node tiles.
# ---------------------------------------------------------------------------------------
def _pool_kernel(x_ref, bid_ref,
                 gw1_ref, gb1_ref, gg1_ref, gbt1_ref, gw2_ref, gb2_ref,
                 acc_out_ref, l_out_ref,
                 m_scr, l_scr, acc_scr):
    t = pl.program_id(0)

    @pl.when(t == 0)
    def _init():
        m_scr[...] = jnp.full(m_scr.shape, _NEG_BIG, m_scr.dtype)
        l_scr[...] = jnp.zeros(l_scr.shape, l_scr.dtype)
        acc_scr[...] = jnp.zeros(acc_scr.shape, acc_scr.dtype)

    x = x_ref[...]                                       # [TN, D]  (MXU operand dtype)
    bids = bid_ref[...]                                  # [TN, 1]  int32
    tile_n = x.shape[0]
    b_pad = l_scr.shape[1]

    # ---- gate_nn: Linear(D,2D) -> LayerNorm(2D) -> ReLU -> Linear(2D,1) -------------
    h = jnp.dot(x, gw1_ref[...], preferred_element_type=jnp.float32) + gb1_ref[...]
    h = _layernorm_rows(h, gg1_ref[...], gbt1_ref[...])
    h = jnp.maximum(h, 0.0)
    # 2D->1 projection on the MXU: gate_w2 is zero-padded to [2D, 128]; lane 0 is real.
    gate = jnp.dot(h.astype(gw2_ref.dtype), gw2_ref[...],
                   preferred_element_type=jnp.float32)[:, 0:1] + gb2_ref[...]   # [TN,1]

    # ---- online segment softmax (flash-attention style), lane-dense over graphs -----
    seg = jax.lax.broadcasted_iota(jnp.int32, (tile_n, b_pad), 1)
    mask = seg == bids                                   # [TN, Bp]
    maskf = mask.astype(jnp.float32)

    tile_max = jnp.max(jnp.where(mask, gate, _NEG_BIG), axis=0, keepdims=True)  # [1,Bp]
    m_old = m_scr[...]
    m_new = jnp.maximum(m_old, tile_max)
    alpha = jnp.exp(m_old - m_new)                       # [1, Bp]
    m_scr[...] = m_new

    per_node_max = jnp.sum(maskf * m_new, axis=1, keepdims=True)                # [TN,1]
    # min(., 0) is exact for matched rows (gate <= its graph's running max) and prevents
    # exp overflow / NaN poisoning for padded rows whose batch id matches no column.
    p = jnp.exp(jnp.minimum(gate - per_node_max, 0.0))                          # [TN,1]
    pw = maskf * p                                                               # [TN,Bp]

    l_scr[...] = alpha * l_scr[...] + jnp.sum(pw, axis=0, keepdims=True)
    # acc[b, d] += sum_n pw[n, b] * x[n, d]   (MXU, contraction K = TILE_N)
    contrib = jax.lax.dot_general(pw.astype(x.dtype), x,
                                  (((0,), (0,)), ((), ())),
                                  preferred_element_type=jnp.float32)            # [Bp,D]
    acc_scr[...] = jnp.transpose(alpha) * acc_scr[...] + contrib

    @pl.when(t == pl.num_programs(0) - 1)
    def _writeback():
        acc_out_ref[...] = acc_scr[...]
        l_out_ref[...] = l_scr[...]


# ---------------------------------------------------------------------------------------
# Kernel 2: finalize — softmax division, pool LayerNorm and the classifier MLP (B rows).
# ---------------------------------------------------------------------------------------
def _finalize_kernel(acc_ref, l_ref, pg_ref, pb_ref,
                     mw1_ref, mb1_ref, mg_ref, mbt_ref, mw2_ref, mb2_ref,
                     out_ref):
    l_col = jnp.transpose(l_ref[...])                                  # [Bp, 1]
    # Empty / padded graph rows (l == 0) produce zeros instead of inf/NaN; they are
    # sliced off in the wrapper.
    denom = jnp.where(l_col > 0.0, l_col, 1.0)
    pooled = acc_ref[...] * pl.reciprocal(denom, approx=True)          # [Bp, D]
    pooled = _layernorm_rows(pooled, pg_ref[...], pb_ref[...])
    z = jnp.dot(pooled.astype(mw1_ref.dtype), mw1_ref[...],
                preferred_element_type=jnp.float32) + mb1_ref[...]     # [Bp, H]
    z = _layernorm_rows(z, mg_ref[...], mbt_ref[...])
    z = jnp.maximum(z, 0.0)
    # TODO(synk): nn.Dropout(0.25) is inference-mode identity here (no RNG masking).
    logits = jnp.dot(z.astype(mw2_ref.dtype), mw2_ref[...],
                     preferred_element_type=jnp.float32) + mb2_ref[...]
    out_ref[...] = logits.astype(out_ref.dtype)                        # [Bp, Opad]


def _hw_budget():
    """Generation-aware VMEM limit and default node-tile size."""
    cap = 64 * 1024 * 1024
    try:
        cap = int(getattr(pltpu.get_tpu_info(), "vmem_capacity_bytes", cap))
    except Exception:
        pass
    vmem_limit = min(cap * 3 // 4, 96 * 1024 * 1024)   # ~48 MiB on 64 MiB parts, 96 MiB on 128 MiB
    default_tile = 1024 if cap >= 100 * 1024 * 1024 else 512
    return vmem_limit, default_tile


@functools.partial(jax.jit, static_argnames=("num_graphs", "max_tile_n", "mxu_dtype"))
def cls_decoder_forward(x, batch_ids, params, num_graphs, max_tile_n=None,
                        mxu_dtype=jnp.bfloat16):
    N, D = x.shape
    out_dim = params["mlp_w2"].shape[1]

    vmem_limit, default_tile = _hw_budget()
    if max_tile_n is None:
        max_tile_n = default_tile
    max_tile_n = max(_round_up(max_tile_n, _LANE), _LANE)

    # dtype-aware sublane rounding: bf16 packs 16 rows per vreg, f32 packs 8.
    sub = 16 if mxu_dtype == jnp.bfloat16 else 8
    tile_n = min(max_tile_n, _round_up(max(N, sub), sub))
    n_pad = _round_up(max(N, tile_n), tile_n)
    n_tiles = n_pad // tile_n

    b_pad = _round_up(num_graphs, _LANE)                 # lane-dense graph axis
    out_pad = _round_up(out_dim, _LANE)                  # lane-dense classifier width

    x_p = jnp.pad(x.astype(mxu_dtype), ((0, n_pad - N), (0, 0)))
    # padded nodes get graph id == num_graphs: either a padded column (sliced off later)
    # or, when num_graphs is already a multiple of 128, no column at all (guarded in-kernel).
    bid_p = jnp.pad(batch_ids.astype(jnp.int32), (0, n_pad - N),
                    constant_values=num_graphs).reshape(n_pad, 1)

    gate_w2 = jnp.pad(params["gate_w2"],
                      ((0, 0), (0, _LANE - params["gate_w2"].shape[1])))

    pool_args = (
        x_p, bid_p,
        params["gate_w1"].astype(mxu_dtype), params["gate_b1"],
        params["gate_ln_g"], params["gate_ln_b"],
        gate_w2.astype(mxu_dtype), params["gate_b2"],
    )

    node_map = lambda t: (t, 0)
    const_map = lambda t: (0, 0)
    resident = pl.Buffered(1)        # weights are fetched once; don't double-buffer them
    in_specs = [pl.BlockSpec((tile_n, D), node_map),
                pl.BlockSpec((tile_n, 1), node_map)]
    in_specs += [pl.BlockSpec(a.shape, const_map, pipeline_mode=resident)
                 for a in pool_args[2:]]

    acc, l = pl.pallas_call(
        _pool_kernel,
        out_shape=(jax.ShapeDtypeStruct((b_pad, D), jnp.float32),
                   jax.ShapeDtypeStruct((1, b_pad), jnp.float32)),
        grid_spec=pltpu.PrefetchScalarGridSpec(
            num_scalar_prefetch=0,
            grid=(n_tiles,),
            in_specs=in_specs,
            out_specs=(pl.BlockSpec((b_pad, D), const_map),
                       pl.BlockSpec((1, b_pad), const_map)),
            scratch_shapes=[pltpu.VMEM((1, b_pad), jnp.float32),    # running max
                            pltpu.VMEM((1, b_pad), jnp.float32),    # running denominator
                            pltpu.VMEM((b_pad, D), jnp.float32)],   # pooled accumulator
        ),
        compiler_params=pltpu.CompilerParams(
            # TODO(synk): on v7x (2 TensorCores) split the node loop across cores with
            # per-core partial (m, l, acc) and merge them in the finalize call.
            # TODO(synk): for sorted (PyG) batch_ids, scalar-prefetch per-tile graph
            # ranges to shrink the [TN, B] mask to the graphs present in the tile.
            dimension_semantics=("arbitrary",),
            vmem_limit_bytes=vmem_limit,
        ),
    )(*pool_args)

    mlp_w2 = jnp.pad(params["mlp_w2"], ((0, 0), (0, out_pad - out_dim)))
    mlp_b2 = jnp.pad(params["mlp_b2"], ((0, 0), (0, out_pad - out_dim)))

    fin_args = (
        acc, l,
        params["pool_ln_g"], params["pool_ln_b"],
        params["mlp_w1"].astype(mxu_dtype), params["mlp_b1"],
        params["mlp_ln_g"], params["mlp_ln_b"],
        mlp_w2.astype(mxu_dtype), mlp_b2,
    )

    logits = pl.pallas_call(
        _finalize_kernel,
        out_shape=jax.ShapeDtypeStruct((b_pad, out_pad), jnp.float32),
        grid_spec=pltpu.PrefetchScalarGridSpec(
            num_scalar_prefetch=0,
            grid=(1,),
            in_specs=[pl.BlockSpec(a.shape, const_map) for a in fin_args],
            out_specs=pl.BlockSpec((b_pad, out_pad), const_map),
        ),
        compiler_params=pltpu.CompilerParams(
            dimension_semantics=("arbitrary",),
            vmem_limit_bytes=vmem_limit,
        ),
    )(*fin_args)

    return logits[:num_graphs, :out_dim]                # [num_graphs, out_dim]


def init_params(key, in_dim, h_dim, out_dim):
    ks = jax.random.split(key, 8)

    def kaiming(k, fan_in, shape):
        bound = (6.0 / fan_in) ** 0.5
        return jax.random.uniform(k, shape, jnp.float32, -bound, bound)

    def bias(k, fan_in, shape):
        bound = 1.0 / (fan_in ** 0.5)
        return jax.random.uniform(k, shape, jnp.float32, -bound, bound)

    return {
        # gate: Linear(D, 2D), LayerNorm(2D), Linear(2D, 1)
        "gate_w1": kaiming(ks[0], in_dim, (in_dim, 2 * in_dim)),
        "gate_b1": bias(ks[1], in_dim, (1, 2 * in_dim)),
        "gate_ln_g": jnp.ones((1, 2 * in_dim), jnp.float32),
        "gate_ln_b": jnp.zeros((1, 2 * in_dim), jnp.float32),
        "gate_w2": kaiming(ks[2], 2 * in_dim, (2 * in_dim, 1)),
        "gate_b2": bias(ks[3], 2 * in_dim, (1, 1)),
        # pool_norm: LayerNorm(D)
        "pool_ln_g": jnp.ones((1, in_dim), jnp.float32),
        "pool_ln_b": jnp.zeros((1, in_dim), jnp.float32),
        # mlp: Linear(D, H), LayerNorm(H), Linear(H, out_dim)
        "mlp_w1": kaiming(ks[4], in_dim, (in_dim, h_dim)),
        "mlp_b1": bias(ks[5], in_dim, (1, h_dim)),
        "mlp_ln_g": jnp.ones((1, h_dim), jnp.float32),
        "mlp_ln_b": jnp.zeros((1, h_dim), jnp.float32),
        "mlp_w2": kaiming(ks[6], h_dim, (h_dim, out_dim)),
        "mlp_b2": bias(ks[7], h_dim, (1, out_dim)),
    }


def reference_forward(x, batch_ids, params, num_graphs, mxu_dtype=jnp.float32):
    """Pure-JAX reference mirroring the PyTorch module (dropout = identity).
    mxu_dtype applies the same operand casts as the kernel's fast path."""
    def mm(a, b):
        return jnp.dot(a.astype(mxu_dtype), b.astype(mxu_dtype),
                       preferred_element_type=jnp.float32)

    h = mm(x, params["gate_w1"]) + params["gate_b1"]
    h = _layernorm_rows(h, params["gate_ln_g"], params["gate_ln_b"])
    h = jnp.maximum(h, 0.0)
    gate = mm(h, params["gate_w2"]) + params["gate_b2"]               # [N, 1]
    mask = batch_ids[:, None] == jnp.arange(num_graphs)[None, :]      # [N, B]
    scores = jnp.where(mask, gate, -1e30)
    scores = scores - jnp.max(scores, axis=0, keepdims=True)
    w = jnp.exp(scores) * mask.astype(jnp.float32)
    w = w / jnp.sum(w, axis=0, keepdims=True)
    pooled = mm(w.T, x)                                               # [B, D]
    pooled = _layernorm_rows(pooled, params["pool_ln_g"], params["pool_ln_b"])
    z = mm(pooled, params["mlp_w1"]) + params["mlp_b1"]
    z = _layernorm_rows(z, params["mlp_ln_g"], params["mlp_ln_b"])
    z = jnp.maximum(z, 0.0)
    return mm(z, params["mlp_w2"]) + params["mlp_b2"]


if __name__ == "__main__":
    in_dim, h_dim, out_dim = 32, 32, 16
    num_nodes, num_graphs = 16, 2

    key = jax.random.PRNGKey(0)
    kx, kp = jax.random.split(key)
    x = jax.random.normal(kx, (num_nodes, in_dim), jnp.float32)
    # two graphs: nodes 0..7 -> graph 0, nodes 8..15 -> graph 1
    batch_ids = jnp.concatenate([jnp.zeros(8, jnp.int32), jnp.ones(8, jnp.int32)])
    params = init_params(kp, in_dim, h_dim, out_dim)

    # exact-math path (f32 MXU operands) vs the f32 reference
    out_f32 = cls_decoder_forward(x, batch_ids, params, num_graphs=num_graphs,
                                  mxu_dtype=jnp.float32)
    jax.block_until_ready(out_f32)
    ref_f32 = reference_forward(x, batch_ids, params, num_graphs, jnp.float32)
    np.testing.assert_allclose(np.asarray(out_f32), np.asarray(ref_f32),
                               rtol=1e-2, atol=1e-2)

    # default fast path (bf16 MXU operands, f32 accumulation) vs a cast-matched reference
    out_bf16 = cls_decoder_forward(x, batch_ids, params, num_graphs=num_graphs)
    jax.block_until_ready(out_bf16)
    ref_bf16 = reference_forward(x, batch_ids, params, num_graphs, jnp.bfloat16)
    np.testing.assert_allclose(np.asarray(out_bf16), np.asarray(ref_bf16),
                               rtol=2e-2, atol=2e-2)

    print("KERNEL_OK")
</pallas_src>

<mosaic_0001>
module attributes {stable_mosaic.version = 11 : i64} {
  func.func @_finalize_kernel(%arg0: i32, %arg1: memref<128x32xf32, #tpu.memory_space<vmem>>, %arg2: memref<1x128xf32, #tpu.memory_space<vmem>>, %arg3: memref<1x32xf32, #tpu.memory_space<vmem>>, %arg4: memref<1x32xf32, #tpu.memory_space<vmem>>, %arg5: memref<32x32xf32, #tpu.memory_space<vmem>>, %arg6: memref<1x32xf32, #tpu.memory_space<vmem>>, %arg7: memref<1x32xf32, #tpu.memory_space<vmem>>, %arg8: memref<1x32xf32, #tpu.memory_space<vmem>>, %arg9: memref<32x128xf32, #tpu.memory_space<vmem>>, %arg10: memref<1x128xf32, #tpu.memory_space<vmem>>, %arg11: memref<128x128xf32, #tpu.memory_space<vmem>>) attributes {dimension_semantics = [#tpu.dimension_semantics<arbitrary>], iteration_bounds = array<i64: 1>, scalar_prefetch = 0 : i64, scratch_operands = 0 : i64, tpu.core_type = #tpu.core_type<tc>, window_params = [{pipeline_mode = #tpu.pipeline_mode<synchronous>, transform_indices = @transform_0, window_bounds = array<i64: 128, 32>}, {pipeline_mode = #tpu.pipeline_mode<synchronous>, transform_indices = @transform_1, window_bounds = array<i64: 1, 128>}, {pipeline_mode = #tpu.pipeline_mode<synchronous>, transform_indices = @transform_2, window_bounds = array<i64: 1, 32>}, {pipeline_mode = #tpu.pipeline_mode<synchronous>, transform_indices = @transform_3, window_bounds = array<i64: 1, 32>}, {pipeline_mode = #tpu.pipeline_mode<synchronous>, transform_indices = @transform_4, window_bounds = array<i64: 32, 32>}, {pipeline_mode = #tpu.pipeline_mode<synchronous>, transform_indices = @transform_5, window_bounds = array<i64: 1, 32>}, {pipeline_mode = #tpu.pipeline_mode<synchronous>, transform_indices = @transform_6, window_bounds = array<i64: 1, 32>}, {pipeline_mode = #tpu.pipeline_mode<synchronous>, transform_indices = @transform_7, window_bounds = array<i64: 1, 32>}, {pipeline_mode = #tpu.pipeline_mode<synchronous>, transform_indices = @transform_8, window_bounds = array<i64: 32, 128>}, {pipeline_mode = #tpu.pipeline_mode<synchronous>, transform_indices = @transform_9, window_bounds = array<i64: 1, 128>}, {pipeline_mode = #tpu.pipeline_mode<synchronous>, transform_indices = @transform_10, window_bounds = array<i64: 128, 128>}]} {
    %c0 = arith.constant 0 : index
    %c0_0 = arith.constant 0 : index
    %0 = vector.load %arg2[%c0, %c0_0] : memref<1x128xf32, #tpu.memory_space<vmem>>, vector<1x128xf32>
    %1 = tpu.transpose %0, [1, 0] : vector<1x128xf32> -> vector<128x1xf32>
    %cst = arith.constant 0.000000e+00 : f32
    %2 = vector.broadcast %cst : f32 to vector<128x1xf32>
    %3 = arith.cmpf ogt, %1, %2 : vector<128x1xf32>
    %cst_1 = arith.constant 1.000000e+00 : f32
    %4 = vector.broadcast %cst_1 : f32 to vector<128x1xf32>
    %5 = arith.select %3, %1, %4 : vector<128x1xi1>, vector<128x1xf32>
    %c0_2 = arith.constant 0 : index
    %c0_3 = arith.constant 0 : index
    %6 = vector.load %arg1[%c0_2, %c0_3] : memref<128x32xf32, #tpu.memory_space<vmem>>, vector<128x32xf32>
    %7 = tpu.reciprocal %5 {approx = true} : vector<128x1xf32> -> vector<128x1xf32>
    %8 = vector.broadcast %7 : vector<128x1xf32> to vector<128x32xf32>
    %9 = arith.mulf %6, %8 : vector<128x32xf32>
    %c0_4 = arith.constant 0 : index
    %c0_5 = arith.constant 0 : index
    %10 = vector.load %arg3[%c0_4, %c0_5] : memref<1x32xf32, #tpu.memory_space<vmem>>, vector<1x32xf32>
    %c0_6 = arith.constant 0 : index
    %c0_7 = arith.constant 0 : index
    %11 = vector.load %arg4[%c0_6, %c0_7] : memref<1x32xf32, #tpu.memory_space<vmem>>, vector<1x32xf32>
    %cst_8 = arith.constant dense<0.000000e+00> : vector<128xf32>
    %12 = vector.multi_reduction <add>, %9, %cst_8 [1] : vector<128x32xf32> to vector<128xf32>
    %13 = vector.shape_cast %12 : vector<128xf32> to vector<128x1xf32>
    %cst_9 = arith.constant 3.200000e+01 : f32
    %14 = vector.broadcast %cst_9 : f32 to vector<128x1xf32>
    %15 = arith.divf %13, %14 : vector<128x1xf32>
    %16 = vector.broadcast %15 : vector<128x1xf32> to vector<128x32xf32>
    %17 = arith.subf %9, %16 : vector<128x32xf32>
    %18 = arith.mulf %17, %17 : vector<128x32xf32>
    %cst_10 = arith.constant dense<0.000000e+00> : vector<128xf32>
    %19 = vector.multi_reduction <add>, %18, %cst_10 [1] : vector<128x32xf32> to vector<128xf32>
    %20 = vector.shape_cast %19 : vector<128xf32> to vector<128x1xf32>
    %cst_11 = arith.constant 3.200000e+01 : f32
    %21 = vector.broadcast %cst_11 : f32 to vector<128x1xf32>
    %22 = arith.divf %20, %21 : vector<128x1xf32>
    %23 = vector.broadcast %15 : vector<128x1xf32> to vector<128x32xf32>
    %24 = arith.subf %9, %23 : vector<128x32xf32>
    %cst_12 = arith.constant 9.99999974E-6 : f32
    %25 = vector.broadcast %cst_12 : f32 to vector<128x1xf32>
    %26 = arith.addf %22, %25 : vector<128x1xf32>
    %27 = math.rsqrt %26 : vector<128x1xf32>
    %28 = vector.broadcast %27 : vector<128x1xf32> to vector<128x32xf32>
    %29 = arith.mulf %24, %28 : vector<128x32xf32>
    %30 = vector.broadcast %10 : vector<1x32xf32> to vector<128x32xf32>
    %31 = arith.mulf %29, %30 : vector<128x32xf32>
    %32 = vector.broadcast %11 : vector<1x32xf32> to vector<128x32xf32>
    %33 = arith.addf %31, %32 : vector<128x32xf32>
    %c0_13 = arith.constant 0 : index
    %c0_14 = arith.constant 0 : index
    %34 = vector.load %arg5[%c0_13, %c0_14] : memref<32x32xf32, #tpu.memory_space<vmem>>, vector<32x32xf32>
    %cst_15 = arith.constant dense<0.000000e+00> : vector<128x32xf32>
    %35 = tpu.matmul %33, %34, %cst_15 {dimension_numbers = #tpu.dot_dimension_numbers<[1], [0], [0], [1], [0, 0, 1, 1], [], []>} : vector<128x32xf32>, vector<32x32xf32>, vector<128x32xf32> -> vector<128x32xf32>
    %c0_16 = arith.constant 0 : index
    %c0_17 = arith.constant 0 : index
    %36 = vector.load %arg6[%c0_16, %c0_17] : memref<1x32xf32, #tpu.memory_space<vmem>>, vector<1x32xf32>
    %37 = vector.broadcast %36 : vector<1x32xf32> to vector<128x32xf32>
    %38 = arith.addf %35, %37 : vector<128x32xf32>
    %c0_18 = arith.constant 0 : index
    %c0_19 = arith.constant 0 : index
    %39 = vector.load %arg7[%c0_18, %c0_19] : memref<1x32xf32, #tpu.memory_space<vmem>>, vector<1x32xf32>
    %c0_20 = arith.constant 0 : index
    %c0_21 = arith.constant 0 : index
    %40 = vector.load %arg8[%c0_20, %c0_21] : memref<1x32xf32, #tpu.memory_space<vmem>>, vector<1x32xf32>
    %cst_22 = arith.constant dense<0.000000e+00> : vector<128xf32>
    %41 = vector.multi_reduction <add>, %38, %cst_22 [1] : vector<128x32xf32> to vector<128xf32>
    %42 = vector.shape_cast %41 : vector<128xf32> to vector<128x1xf32>
    %cst_23 = arith.constant 3.200000e+01 : f32
    %43 = vector.broadcast %cst_23 : f32 to vector<128x1xf32>
    %44 = arith.divf %42, %43 : vector<128x1xf32>
    %45 = vector.broadcast %44 : vector<128x1xf32> to vector<128x32xf32>
    %46 = arith.subf %38, %45 : vector<128x32xf32>
    %47 = arith.mulf %46, %46 : vector<128x32xf32>
    %cst_24 = arith.constant dense<0.000000e+00> : vector<128xf32>
    %48 = vector.multi_reduction <add>, %47, %cst_24 [1] : vector<128x32xf32> to vector<128xf32>
    %49 = vector.shape_cast %48 : vector<128xf32> to vector<128x1xf32>
    %cst_25 = arith.constant 3.200000e+01 : f32
    %50 = vector.broadcast %cst_25 : f32 to vector<128x1xf32>
    %51 = arith.divf %49, %50 : vector<128x1xf32>
    %52 = vector.broadcast %44 : vector<128x1xf32> to vector<128x32xf32>
    %53 = arith.subf %38, %52 : vector<128x32xf32>
    %cst_26 = arith.constant 9.99999974E-6 : f32
    %54 = vector.broadcast %cst_26 : f32 to vector<128x1xf32>
    %55 = arith.addf %51, %54 : vector<128x1xf32>
    %56 = math.rsqrt %55 : vector<128x1xf32>
    %57 = vector.broadcast %56 : vector<128x1xf32> to vector<128x32xf32>
    %58 = arith.mulf %53, %57 : vector<128x32xf32>
    %59 = vector.broadcast %39 : vector<1x32xf32> to vector<128x32xf32>
    %60 = arith.mulf %58, %59 : vector<128x32xf32>
    %61 = vector.broadcast %40 : vector<1x32xf32> to vector<128x32xf32>
    %62 = arith.addf %60, %61 : vector<128x32xf32>
    %cst_27 = arith.constant 0.000000e+00 : f32
    %63 = vector.broadcast %cst_27 : f32 to vector<128x32xf32>
    %64 = arith.maximumf %62, %63 : vector<128x32xf32>
    %c0_28 = arith.constant 0 : index
    %c0_29 = arith.constant 0 : index
    %65 = vector.load %arg9[%c0_28, %c0_29] : memref<32x128xf32, #tpu.memory_space<vmem>>, vector<32x128xf32>
    %cst_30 = arith.constant dense<0.000000e+00> : vector<128x128xf32>
    %66 = tpu.matmul %64, %65, %cst_30 {dimension_numbers = #tpu.dot_dimension_numbers<[1], [0], [0], [1], [0, 0, 1, 1], [], []>} : vector<128x32xf32>, vector<32x128xf32>, vector<128x128xf32> -> vector<128x128xf32>
    %c0_31 = arith.constant 0 : index
    %c0_32 = arith.constant 0 : index
    %67 = vector.load %arg10[%c0_31, %c0_32] : memref<1x128xf32, #tpu.memory_space<vmem>>, vector<1x128xf32>
    %68 = vector.broadcast %67 : vector<1x128xf32> to vector<128x128xf32>
    %69 = arith.addf %66, %68 : vector<128x128xf32>
    %c0_33 = arith.constant 0 : index
    %c0_34 = arith.constant 0 : index
    %70 = vector.load %arg11[%c0_33, %c0_34] : memref<128x128xf32, #tpu.memory_space<vmem>>, vector<128x128xf32>
    tpu.vector_store %arg11[%c0_33, %c0_34], %69 {strides = array<i32>} : memref<128x128xf32, #tpu.memory_space<vmem>>, vector<128x128xf32>,
    return
  }
  func.func @transform_0(%arg0: i32) -> (i32, i32) {
    %c0_i32 = arith.constant 0 : i32
    %c0_i32_0 = arith.constant 0 : i32
    %c0_i32_1 = arith.constant 0 : i32
    return %c0_i32, %c0_i32_0 : i32, i32
  }
  func.func @transform_1(%arg0: i32) -> (i32, i32) {
    %c0_i32 = arith.constant 0 : i32
    %c0_i32_0 = arith.constant 0 : i32
    %c0_i32_1 = arith.constant 0 : i32
    return %c0_i32, %c0_i32_0 : i32, i32
  }
  func.func @transform_2(%arg0: i32) -> (i32, i32) {
    %c0_i32 = arith.constant 0 : i32
    %c0_i32_0 = arith.constant 0 : i32
    %c0_i32_1 = arith.constant 0 : i32
    return %c0_i32, %c0_i32_0 : i32, i32
  }
  func.func @transform_3(%arg0: i32) -> (i32, i32) {
    %c0_i32 = arith.constant 0 : i32
    %c0_i32_0 = arith.constant 0 : i32
    %c0_i32_1 = arith.constant 0 : i32
    return %c0_i32, %c0_i32_0 : i32, i32
  }
  func.func @transform_4(%arg0: i32) -> (i32, i32) {
    %c0_i32 = arith.constant 0 : i32
    %c0_i32_0 = arith.constant 0 : i32
    %c0_i32_1 = arith.constant 0 : i32
    return %c0_i32, %c0_i32_0 : i32, i32
  }
  func.func @transform_5(%arg0: i32) -> (i32, i32) {
    %c0_i32 = arith.constant 0 : i32
    %c0_i32_0 = arith.constant 0 : i32
    %c0_i32_1 = arith.constant 0 : i32
    return %c0_i32, %c0_i32_0 : i32, i32
  }
  func.func @transform_6(%arg0: i32) -> (i32, i32) {
    %c0_i32 = arith.constant 0 : i32
    %c0_i32_0 = arith.constant 0 : i32
    %c0_i32_1 = arith.constant 0 : i32
    return %c0_i32, %c0_i32_0 : i32, i32
  }
  func.func @transform_7(%arg0: i32) -> (i32, i32) {
    %c0_i32 = arith.constant 0 : i32
    %c0_i32_0 = arith.constant 0 : i32
    %c0_i32_1 = arith.constant 0 : i32
    return %c0_i32, %c0_i32_0 : i32, i32
  }
  func.func @transform_8(%arg0: i32) -> (i32, i32) {
    %c0_i32 = arith.constant 0 : i32
    %c0_i32_0 = arith.constant 0 : i32
    %c0_i32_1 = arith.constant 0 : i32
    return %c0_i32, %c0_i32_0 : i32, i32
  }
  func.func @transform_9(%arg0: i32) -> (i32, i32) {
    %c0_i32 = arith.constant 0 : i32
    %c0_i32_0 = arith.constant 0 : i32
    %c0_i32_1 = arith.constant 0 : i32
    return %c0_i32, %c0_i32_0 : i32, i32
  }
  func.func @transform_10(%arg0: i32) -> (i32, i32) {
    %c0_i32 = arith.constant 0 : i32
    %c0_i32_0 = arith.constant 0 : i32
    %c0_i32_1 = arith.constant 0 : i32
    return %c0_i32, %c0_i32_0 : i32, i32
  }
}

module attributes {stable_mosaic.version = 11 : i64} {
  func.func @_pool_kernel(%arg0: i32, %arg1: memref<16x32xf32, #tpu.memory_space<vmem>>, %arg2: memref<16x1xi32, #tpu.memory_space<vmem>>, %arg3: memref<32x64xf32, #tpu.memory_space<vmem>>, %arg4: memref<1x64xf32, #tpu.memory_space<vmem>>, %arg5: memref<1x64xf32, #tpu.memory_space<vmem>>, %arg6: memref<1x64xf32, #tpu.memory_space<vmem>>, %arg7: memref<64x128xf32, #tpu.memory_space<vmem>>, %arg8: memref<1x1xf32, #tpu.memory_space<vmem>>, %arg9: memref<128x32xf32, #tpu.memory_space<vmem>>, %arg10: memref<1x128xf32, #tpu.memory_space<vmem>>, %arg11: memref<1x128xf32, #tpu.memory_space<vmem>>, %arg12: memref<1x128xf32, #tpu.memory_space<vmem>>, %arg13: memref<128x32xf32, #tpu.memory_space<vmem>>) attributes {dimension_semantics = [#tpu.dimension_semantics<arbitrary>], iteration_bounds = array<i64: 1>, scalar_prefetch = 0 : i64, scratch_operands = 3 : i64, tpu.core_type = #tpu.core_type<tc>, window_params = [{transform_indices = @transform_0, window_bounds = array<i64: 16, 32>}, {transform_indices = @transform_1, window_bounds = array<i64: 16, 1>}, {pipeline_mode = #tpu.pipeline_mode<synchronous>, transform_indices = @transform_2, window_bounds = array<i64: 32, 64>}, {pipeline_mode = #tpu.pipeline_mode<synchronous>, transform_indices = @transform_3, window_bounds = array<i64: 1, 64>}, {pipeline_mode = #tpu.pipeline_mode<synchronous>, transform_indices = @transform_4, window_bounds = array<i64: 1, 64>}, {pipeline_mode = #tpu.pipeline_mode<synchronous>, transform_indices = @transform_5, window_bounds = array<i64: 1, 64>}, {pipeline_mode = #tpu.pipeline_mode<synchronous>, transform_indices = @transform_6, window_bounds = array<i64: 64, 128>}, {pipeline_mode = #tpu.pipeline_mode<synchronous>, transform_indices = @transform_7, window_bounds = array<i64: 1, 1>}, {pipeline_mode = #tpu.pipeline_mode<synchronous>, transform_indices = @transform_8, window_bounds = array<i64: 128, 32>}, {pipeline_mode = #tpu.pipeline_mode<synchronous>, transform_indices = @transform_9, window_bounds = array<i64: 1, 128>}]} {
    %c0_i32 = arith.constant 0 : i32
    %0 = arith.cmpi eq, %arg0, %c0_i32 : i32
    %1 = arith.extui %0 : i1 to i32
    %c0_i32_0 = arith.constant 0 : i32
    %2 = arith.cmpi ne, %1, %c0_i32_0 : i32
    scf.if %2 {
      %cst_43 = arith.constant -1.000000e+30 : f32
      %84 = vector.broadcast %cst_43 : f32 to vector<1x128xf32>
      %c0_44 = arith.constant 0 : index
      %c0_45 = arith.constant 0 : index
      %85 = vector.load %arg11[%c0_44, %c0_45] : memref<1x128xf32, #tpu.memory_space<vmem>>, vector<1x128xf32>
      tpu.vector_store %arg11[%c0_44, %c0_45], %84 {strides = array<i32>} : memref<1x128xf32, #tpu.memory_space<vmem>>, vector<1x128xf32>,
      %cst_46 = arith.constant 0.000000e+00 : f32
      %86 = vector.broadcast %cst_46 : f32 to vector<1x128xf32>
      %c0_47 = arith.constant 0 : index
      %c0_48 = arith.constant 0 : index
      %87 = vector.load %arg12[%c0_47, %c0_48] : memref<1x128xf32, #tpu.memory_space<vmem>>, vector<1x128xf32>
      tpu.vector_store %arg12[%c0_47, %c0_48], %86 {strides = array<i32>} : memref<1x128xf32, #tpu.memory_space<vmem>>, vector<1x128xf32>,
      %cst_49 = arith.constant 0.000000e+00 : f32
      %88 = vector.broadcast %cst_49 : f32 to vector<128x32xf32>
      %c0_50 = arith.constant 0 : index
      %c0_51 = arith.constant 0 : index
      %89 = vector.load %arg13[%c0_50, %c0_51] : memref<128x32xf32, #tpu.memory_space<vmem>>, vector<128x32xf32>
      tpu.vector_store %arg13[%c0_50, %c0_51], %88 {strides = array<i32>} : memref<128x32xf32, #tpu.memory_space<vmem>>, vector<128x32xf32>,
    } else {
    }
    %c0 = arith.constant 0 : index
    %c0_1 = arith.constant 0 : index
    %3 = vector.load %arg1[%c0, %c0_1] : memref<16x32xf32, #tpu.memory_space<vmem>>, vector<16x32xf32>
    %c0_2 = arith.constant 0 : index
    %c0_3 = arith.constant 0 : index
    %4 = vector.load %arg2[%c0_2, %c0_3] : memref<16x1xi32, #tpu.memory_space<vmem>>, vector<16x1xi32>
    %c0_4 = arith.constant 0 : index
    %c0_5 = arith.constant 0 : index
    %5 = vector.load %arg3[%c0_4, %c0_5] : memref<32x64xf32, #tpu.memory_space<vmem>>, vector<32x64xf32>
    %cst = arith.constant dense<0.000000e+00> : vector<16x64xf32>
    %6 = tpu.matmul %3, %5, %cst {dimension_numbers = #tpu.dot_dimension_numbers<[1], [0], [0], [1], [0, 0, 1, 1], [], []>} : vector<16x32xf32>, vector<32x64xf32>, vector<16x64xf32> -> vector<16x64xf32>
    %c0_6 = arith.constant 0 : index
    %c0_7 = arith.constant 0 : index
    %7 = vector.load %arg4[%c0_6, %c0_7] : memref<1x64xf32, #tpu.memory_space<vmem>>, vector<1x64xf32>
    %8 = vector.broadcast %7 : vector<1x64xf32> to vector<16x64xf32>
    %9 = arith.addf %6, %8 : vector<16x64xf32>
    %c0_8 = arith.constant 0 : index
    %c0_9 = arith.constant 0 : index
    %10 = vector.load %arg5[%c0_8, %c0_9] : memref<1x64xf32, #tpu.memory_space<vmem>>, vector<1x64xf32>
    %c0_10 = arith.constant 0 : index
    %c0_11 = arith.constant 0 : index
    %11 = vector.load %arg6[%c0_10, %c0_11] : memref<1x64xf32, #tpu.memory_space<vmem>>, vector<1x64xf32>
    %cst_12 = arith.constant dense<0.000000e+00> : vector<16xf32>
    %12 = vector.multi_reduction <add>, %9, %cst_12 [1] : vector<16x64xf32> to vector<16xf32>
    %13 = vector.shape_cast %12 : vector<16xf32> to vector<16x1xf32>
    %cst_13 = arith.constant 6.400000e+01 : f32
    %14 = vector.broadcast %cst_13 : f32 to vector<16x1xf32>
    %15 = arith.divf %13, %14 : vector<16x1xf32>
    %16 = vector.broadcast %15 : vector<16x1xf32> to vector<16x64xf32>
    %17 = arith.subf %9, %16 : vector<16x64xf32>
    %18 = arith.mulf %17, %17 : vector<16x64xf32>
    %cst_14 = arith.constant dense<0.000000e+00> : vector<16xf32>
    %19 = vector.multi_reduction <add>, %18, %cst_14 [1] : vector<16x64xf32> to vector<16xf32>
    %20 = vector.shape_cast %19 : vector<16xf32> to vector<16x1xf32>
    %cst_15 = arith.constant 6.400000e+01 : f32
    %21 = vector.broadcast %cst_15 : f32 to vector<16x1xf32>
    %22 = arith.divf %20, %21 : vector<16x1xf32>
    %23 = vector.broadcast %15 : vector<16x1xf32> to vector<16x64xf32>
    %24 = arith.subf %9, %23 : vector<16x64xf32>
    %cst_16 = arith.constant 9.99999974E-6 : f32
    %25 = vector.broadcast %cst_16 : f32 to vector<16x1xf32>
    %26 = arith.addf %22, %25 : vector<16x1xf32>
    %27 = math.rsqrt %26 : vector<16x1xf32>
    %28 = vector.broadcast %27 : vector<16x1xf32> to vector<16x64xf32>
    %29 = arith.mulf %24, %28 : vector<16x64xf32>
    %30 = vector.broadcast %10 : vector<1x64xf32> to vector<16x64xf32>
    %31 = arith.mulf %29, %30 : vector<16x64xf32>
    %32 = vector.broadcast %11 : vector<1x64xf32> to vector<16x64xf32>
    %33 = arith.addf %31, %32 : vector<16x64xf32>
    %cst_17 = arith.constant 0.000000e+00 : f32
    %34 = vector.broadcast %cst_17 : f32 to vector<16x64xf32>
    %35 = arith.maximumf %33, %34 : vector<16x64xf32>
    %c0_18 = arith.constant 0 : index
    %c0_19 = arith.constant 0 : index
    %36 = vector.load %arg7[%c0_18, %c0_19] : memref<64x128xf32, #tpu.memory_space<vmem>>, vector<64x128xf32>
    %cst_20 = arith.constant dense<0.000000e+00> : vector<16x128xf32>
    %37 = tpu.matmul %35, %36, %cst_20 {dimension_numbers = #tpu.dot_dimension_numbers<[1], [0], [0], [1], [0, 0, 1, 1], [], []>} : vector<16x64xf32>, vector<64x128xf32>, vector<16x128xf32> -> vector<16x128xf32>
    %38 = vector.extract_strided_slice %37 {offsets = [0, 0], sizes = [16, 1], strides = [1, 1]} : vector<16x128xf32> to vector<16x1xf32>
    %c0_21 = arith.constant 0 : index
    %c0_22 = arith.constant 0 : index
    %39 = vector.load %arg8[%c0_21, %c0_22] : memref<1x1xf32, #tpu.memory_space<vmem>>, vector<1x1xf32>
    %40 = vector.broadcast %39 : vector<1x1xf32> to vector<16x1xf32>
    %41 = arith.addf %38, %40 : vector<16x1xf32>
    %42 = tpu.iota {dimensions = array<i32: 1>} : vector<16x128xi32>
    %43 = vector.broadcast %4 : vector<16x1xi32> to vector<16x128xi32>
    %44 = arith.cmpi eq, %42, %43 : vector<16x128xi32>
    %45 = arith.extui %44 : vector<16x128xi1> to vector<16x128xi32>
    %46 = arith.sitofp %45 : vector<16x128xi32> to vector<16x128xf32>
    %cst_23 = arith.constant -1.000000e+30 : f32
    %47 = vector.shape_cast %41 : vector<16x1xf32> to vector<16x1xf32>
    %48 = vector.broadcast %47 : vector<16x1xf32> to vector<16x128xf32>
    %49 = vector.broadcast %cst_23 : f32 to vector<16x128xf32>
    %50 = arith.select %44, %48, %49 : vector<16x128xi1>, vector<16x128xf32>
    %cst_24 = arith.constant dense<0xFF800000> : vector<128xf32>
    %51 = vector.multi_reduction <maximumf>, %50, %cst_24 [0] : vector<16x128xf32> to vector<128xf32>
    %52 = vector.shape_cast %51 : vector<128xf32> to vector<1x128xf32>
    %c0_25 = arith.constant 0 : index
    %c0_26 = arith.constant 0 : index
    %53 = vector.load %arg11[%c0_25, %c0_26] : memref<1x128xf32, #tpu.memory_space<vmem>>, vector<1x128xf32>
    %54 = arith.maximumf %53, %52 : vector<1x128xf32>
    %55 = arith.subf %53, %54 : vector<1x128xf32>
    %56 = math.exp %55 : vector<1x128xf32>
    %c0_27 = arith.constant 0 : index
    %c0_28 = arith.constant 0 : index
    %57 = vector.load %arg11[%c0_27, %c0_28] : memref<1x128xf32, #tpu.memory_space<vmem>>, vector<1x128xf32>
    tpu.vector_store %arg11[%c0_27, %c0_28], %54 {strides = array<i32>} : memref<1x128xf32, #tpu.memory_space<vmem>>, vector<1x128xf32>,
    %58 = vector.broadcast %54 : vector<1x128xf32> to vector<16x128xf32>
    %59 = arith.mulf %46, %58 : vector<16x128xf32>
    %cst_29 = arith.constant dense<0.000000e+00> : vector<16xf32>
    %60 = vector.multi_reduction <add>, %59, %cst_29 [1] : vector<16x128xf32> to vector<16xf32>
    %61 = vector.shape_cast %60 : vector<16xf32> to vector<16x1xf32>
    %62 = arith.subf %41, %61 : vector<16x1xf32>
    %cst_30 = arith.constant 0.000000e+00 : f32
    %63 = vector.broadcast %cst_30 : f32 to vector<16x1xf32>
    %64 = arith.minimumf %62, %63 : vector<16x1xf32>
    %65 = math.exp %64 : vector<16x1xf32>
    %66 = vector.broadcast %65 : vector<16x1xf32> to vector<16x128xf32>
    %67 = arith.mulf %46, %66 : vector<16x128xf32>
    %c0_31 = arith.constant 0 : index
    %c0_32 = arith.constant 0 : index
    %68 = vector.load %arg12[%c0_31, %c0_32] : memref<1x128xf32, #tpu.memory_space<vmem>>, vector<1x128xf32>
    %69 = arith.mulf %56, %68 : vector<1x128xf32>
    %cst_33 = arith.constant dense<0.000000e+00> : vector<128xf32>
    %70 = vector.multi_reduction <add>, %67, %cst_33 [0] : vector<16x128xf32> to vector<128xf32>
    %71 = vector.shape_cast %70 : vector<128xf32> to vector<1x128xf32>
    %72 = arith.addf %69, %71 : vector<1x128xf32>
    %c0_34 = arith.constant 0 : index
    %c0_35 = arith.constant 0 : index
    %73 = vector.load %arg12[%c0_34, %c0_35] : memref<1x128xf32, #tpu.memory_space<vmem>>, vector<1x128xf32>
    tpu.vector_store %arg12[%c0_34, %c0_35], %72 {strides = array<i32>} : memref<1x128xf32, #tpu.memory_space<vmem>>, vector<1x128xf32>,
    %cst_36 = arith.constant dense<0.000000e+00> : vector<128x32xf32>
    %74 = tpu.matmul %67, %3, %cst_36 {dimension_numbers = #tpu.dot_dimension_numbers<[0], [0], [1], [1], [0, 1, 1, 1], [], []>} : vector<16x128xf32>, vector<16x32xf32>, vector<128x32xf32> -> vector<128x32xf32>
    %75 = tpu.transpose %56, [1, 0] : vector<1x128xf32> -> vector<128x1xf32>
    %c0_37 = arith.constant 0 : index
    %c0_38 = arith.constant 0 : index
    %76 = vector.load %arg13[%c0_37, %c0_38] : memref<128x32xf32, #tpu.memory_space<vmem>>, vector<128x32xf32>
    %77 = vector.broadcast %75 : vector<128x1xf32> to vector<128x32xf32>
    %78 = arith.mulf %77, %76 : vector<128x32xf32>
    %79 = arith.addf %78, %74 : vector<128x32xf32>
    %c0_39 = arith.constant 0 : index
    %c0_40 = arith.constant 0 : index
    %80 = vector.load %arg13[%c0_39, %c0_40] : memref<128x32xf32, #tpu.memory_space<vmem>>, vector<128x32xf32>
    tpu.vector_store %arg13[%c0_39, %c0_40], %79 {strides = array<i32>} : memref<128x32xf32, #tpu.memory_space<vmem>>, vector<128x32xf32>,
    %c0_i32_41 = arith.constant 0 : i32
    %81 = arith.cmpi eq, %arg0, %c0_i32_41 : i32
    %82 = arith.extui %81 : i1 to i32
    %c0_i32_42 = arith.constant 0 : i32
    %83 = arith.cmpi ne, %82, %c0_i32_42 : i32
    scf.if %83 {
      %c0_43 = arith.constant 0 : index
      %c0_44 = arith.constant 0 : index
      %84 = vector.load %arg13[%c0_43, %c0_44] : memref<128x32xf32, #tpu.memory_space<vmem>>, vector<128x32xf32>
      %c0_45 = arith.constant 0 : index
      %c0_46 = arith.constant 0 : index
      %85 = vector.load %arg9[%c0_45, %c0_46] : memref<128x32xf32, #tpu.memory_space<vmem>>, vector<128x32xf32>
      tpu.vector_store %arg9[%c0_45, %c0_46], %84 {strides = array<i32>} : memref<128x32xf32, #tpu.memory_space<vmem>>, vector<128x32xf32>,
      %c0_47 = arith.constant 0 : index
      %c0_48 = arith.constant 0 : index
      %86 = vector.load %arg12[%c0_47, %c0_48] : memref<1x128xf32, #tpu.memory_space<vmem>>, vector<1x128xf32>
      %c0_49 = arith.constant 0 : index
      %c0_50 = arith.constant 0 : index
      %87 = vector.load %arg10[%c0_49, %c0_50] : memref<1x128xf32, #tpu.memory_space<vmem>>, vector<1x128xf32>
      tpu.vector_store %arg10[%c0_49, %c0_50], %86 {strides = array<i32>} : memref<1x128xf32, #tpu.memory_space<vmem>>, vector<1x128xf32>,
    } else {
    }
    return
  }
  func.func @transform_0(%arg0: i32) -> (i32, i32) {
    %c0_i32 = arith.constant 0 : i32
    %c0_i32_0 = arith.constant 0 : i32
    return %arg0, %c0_i32 : i32, i32
  }
  func.func @transform_1(%arg0: i32) -> (i32, i32) {
    %c0_i32 = arith.constant 0 : i32
    %c0_i32_0 = arith.constant 0 : i32
    return %arg0, %c0_i32 : i32, i32
  }
  func.func @transform_2(%arg0: i32) -> (i32, i32) {
    %c0_i32 = arith.constant 0 : i32
    %c0_i32_0 = arith.constant 0 : i32
    %c0_i32_1 = arith.constant 0 : i32
    return %c0_i32, %c0_i32_0 : i32, i32
  }
  func.func @transform_3(%arg0: i32) -> (i32, i32) {
    %c0_i32 = arith.constant 0 : i32
    %c0_i32_0 = arith.constant 0 : i32
    %c0_i32_1 = arith.constant 0 : i32
    return %c0_i32, %c0_i32_0 : i32, i32
  }
  func.func @transform_4(%arg0: i32) -> (i32, i32) {
    %c0_i32 = arith.constant 0 : i32
    %c0_i32_0 = arith.constant 0 : i32
    %c0_i32_1 = arith.constant 0 : i32
    return %c0_i32, %c0_i32_0 : i32, i32
  }
  func.func @transform_5(%arg0: i32) -> (i32, i32) {
    %c0_i32 = arith.constant 0 : i32
    %c0_i32_0 = arith.constant 0 : i32
    %c0_i32_1 = arith.constant 0 : i32
    return %c0_i32, %c0_i32_0 : i32, i32
  }
  func.func @transform_6(%arg0: i32) -> (i32, i32) {
    %c0_i32 = arith.constant 0 : i32
    %c0_i32_0 = arith.constant 0 : i32
    %c0_i32_1 = arith.constant 0 : i32
    return %c0_i32, %c0_i32_0 : i32, i32
  }
  func.func @transform_7(%arg0: i32) -> (i32, i32) {
    %c0_i32 = arith.constant 0 : i32
    %c0_i32_0 = arith.constant 0 : i32
    %c0_i32_1 = arith.constant 0 : i32
    return %c0_i32, %c0_i32_0 : i32, i32
  }
  func.func @transform_8(%arg0: i32) -> (i32, i32) {
    %c0_i32 = arith.constant 0 : i32
    %c0_i32_0 = arith.constant 0 : i32
    %c0_i32_1 = arith.constant 0 : i32
    return %c0_i32, %c0_i32_0 : i32, i32
  }
  func.func @transform_9(%arg0: i32) -> (i32, i32) {
    %c0_i32 = arith.constant 0 : i32
    %c0_i32_0 = arith.constant 0 : i32
    %c0_i32_1 = arith.constant 0 : i32
    return %c0_i32, %c0_i32_0 : i32, i32
  }
}

</mosaic_0001>

<llo_original>
// kernel: cls_decoder_forward.2
$region0: #{cls_decoder_forward.2}
  #allocation0 [shape = 'u32[]', space=smem, size = 0x4, offset = 0x4, fixed_abs, tag = 'smem constant byte address 0x4 - core index']
  #allocation1 [shape = 'u32[144,128]{1,0:T(1,128)}', space=vmem, size = 0x12000, scoped, tag = 'internal scratch']
  #allocation2 [shape = 'f32[1,128]{1,0:T(1,128)}', space=vmem, size = 0x200, scoped, tag = 'scratch operand']
  #allocation3 [shape = 'f32[1,128]{1,0:T(1,128)}', space=vmem, size = 0x200, scoped, tag = 'scratch operand']
  #allocation4 [shape = 'f32[128,32]{1,0:T(8,128)}', space=vmem, size = 0x10000, scoped, tag = 'scratch operand']
  #allocation5 [shape = 'f32[1,1]{1,0:T(1,128)S(1)}', space=vmem, size = 0x200, scoped, tag = 'scoped memory for cls_decoder_forward.2']
  %s0 = inlined_call_operand.vmem [shape: f32[16,32], index: 0, kind: input, shape index: {}]
  %s1 = inlined_call_operand.vmem [shape: s32[16,1], index: 1, kind: input, shape index: {}]
  %s2 = inlined_call_operand.vmem [shape: f32[32,64], index: 2, kind: input, shape index: {}]
  %s3 = inlined_call_operand.vmem [shape: f32[1,64], index: 3, kind: input, shape index: {}]
  %s4 = inlined_call_operand.vmem [shape: f32[1,64], index: 4, kind: input, shape index: {}]
  %s5 = inlined_call_operand.vmem [shape: f32[1,64], index: 5, kind: input, shape index: {}]
  %s6 = inlined_call_operand.vmem [shape: f32[64,128], index: 6, kind: input, shape index: {}]
  %s7 = inlined_call_operand.<no memory space> [shape: f32[1,1], index: 7, kind: input, shape index: {}]
  %s8 = inlined_call_operand.vmem [shape: f32[128,32], index: 8, kind: output, shape index: {0}]
  %s9 = inlined_call_operand.vmem [shape: f32[1,128], index: 9, kind: output, shape index: {1}]
  %10 = xla_tuple %s8, %s9
  %s11 = sld [smem:[#allocation0]]
  $region58: #{cls_decoder_forward.2} parent=0
    _
  %s13 = ssub.s32 1, %s11
  %s14 = scalar_select 0, %s13, %s11
  %v15 = vstv %s7
  %16 = vst [vmem:[#allocation5] sm:$0x1] %v15
  // Predicated region
  $region2: #{cls_decoder_forward.2} parent=0 // pred_check
    _
  $region3: #{cls_decoder_forward.2} parent=0 // pred_check_branch
    %18 = sbr.rel (0) target = $region5
  $region4: #{cls_decoder_forward.2} parent=0 // pred_region
    _
  $region5: #{cls_decoder_forward.2} parent=0 // pred_fallthru
    _
  // Predicated region
  $region6: #{cls_decoder_forward.2} parent=0 // pred_check
    _
  $region7: #{cls_decoder_forward.2} parent=0 // pred_check_branch
    %20 = sbr.rel (0) target = $region9
  $region8: #{cls_decoder_forward.2} parent=0 // pred_region
    _
  $region9: #{cls_decoder_forward.2} parent=0 // pred_fallthru
    _
  // Predicated region
  $region10: #{cls_decoder_forward.2} parent=0 // pred_check
    _
  $region11: #{cls_decoder_forward.2} parent=0 // pred_check_branch
    %22 = sbr.rel (0) target = $region13
  $region12: #{cls_decoder_forward.2} parent=0 // pred_region
    _
  $region13: #{cls_decoder_forward.2} parent=0 // pred_fallthru
    _
  // Predicated region
  $region14: #{cls_decoder_forward.2} parent=0 // pred_check
    _
  $region15: #{cls_decoder_forward.2} parent=0 // pred_check_branch
    %24 = sbr.rel (0) target = $region17
  $region16: #{cls_decoder_forward.2} parent=0 // pred_region
    _
  $region17: #{cls_decoder_forward.2} parent=0 // pred_fallthru
    _
  // Predicated region
  $region18: #{cls_decoder_forward.2} parent=0 // pred_check
    _
  $region19: #{cls_decoder_forward.2} parent=0 // pred_check_branch
    %26 = sbr.rel (0) target = $region21
  $region20: #{cls_decoder_forward.2} parent=0 // pred_region
    _
  $region21: #{cls_decoder_forward.2} parent=0 // pred_fallthru
    _
  // Predicated region
  $region22: #{cls_decoder_forward.2} parent=0 // pred_check
    _
  $region23: #{cls_decoder_forward.2} parent=0 // pred_check_branch
    %28 = sbr.rel (0) target = $region25
  $region24: #{cls_decoder_forward.2} parent=0 // pred_region
    _
  $region25: #{cls_decoder_forward.2} parent=0 // pred_fallthru
    _
  // Predicated region
  $region26: #{cls_decoder_forward.2} parent=0 // pred_check
    _
  $region27: #{cls_decoder_forward.2} parent=0 // pred_check_branch
    %30 = sbr.rel (0) target = $region29
  $region28: #{cls_decoder_forward.2} parent=0 // pred_region
    _
  $region29: #{cls_decoder_forward.2} parent=0 // pred_fallthru
    _
  // Predicated region
  $region30: #{cls_decoder_forward.2} parent=0 // pred_check
    _
  $region31: #{cls_decoder_forward.2} parent=0 // pred_check_branch
    %32 = sbr.rel (0) target = $region33
  $region32: #{cls_decoder_forward.2} parent=0 // pred_region
    _
  $region33: #{cls_decoder_forward.2} parent=0 // pred_fallthru
    _
  %p33 = scmp.eq.s32.totalorder 0, 0
  // Predicated region
  $region34: #{cls_decoder_forward.2} parent=0 // pred_check
    %p34 = pneg %p33
  $region35: #{cls_decoder_forward.2} parent=0 // pred_check_branch
    %36 = sbr.rel (%p34) target = $region37
  $region36: #{cls_decoder_forward.2} parent=0 // pred_region
    %37 = vst [vmem:[#allocation2] sm:$0x1] -1e+30
    %38 = vst [vmem:[#allocation3] sm:$0x1] 0.0
    %vm39 = vcmask 261120
    %40 = vst.msk [vmem:[#allocation4] sm:$0xff] %vm39, 0.0
    %41 = vst.msk [vmem:[#allocation4 + $0x8] sm:$0xff] %vm39, 0.0
    %42 = vst.msk [vmem:[#allocation4 + $0x10] sm:$0xff] %vm39, 0.0
    %43 = vst.msk [vmem:[#allocation4 + $0x18] sm:$0xff] %vm39, 0.0
    %44 = vst.msk [vmem:[#allocation4 + $0x20] sm:$0xff] %vm39, 0.0
    %45 = vst.msk [vmem:[#allocation4 + $0x28] sm:$0xff] %vm39, 0.0
    %46 = vst.msk [vmem:[#allocation4 + $0x30] sm:$0xff] %vm39, 0.0
    %47 = vst.msk [vmem:[#allocation4 + $0x38] sm:$0xff] %vm39, 0.0
    %48 = vst.msk [vmem:[#allocation4 + $0x40] sm:$0xff] %vm39, 0.0
    %49 = vst.msk [vmem:[#allocation4 + $0x48] sm:$0xff] %vm39, 0.0
    %50 = vst.msk [vmem:[#allocation4 + $0x50] sm:$0xff] %vm39, 0.0
    %51 = vst.msk [vmem:[#allocation4 + $0x58] sm:$0xff] %vm39, 0.0
    %52 = vst.msk [vmem:[#allocation4 + $0x60] sm:$0xff] %vm39, 0.0
    %53 = vst.msk [vmem:[#allocation4 + $0x68] sm:$0xff] %vm39, 0.0
    %54 = vst.msk [vmem:[#allocation4 + $0x70] sm:$0xff] %vm39, 0.0
    %55 = vst.msk [vmem:[#allocation4 + $0x78] sm:$0xff] %vm39, 0.0
  $region37: #{cls_decoder_forward.2} parent=0 // pred_fallthru
    _
  %v56 = vld [vmem:[%s0] sm:$0xff]
  %v57 = vld [vmem:[%s0 + $0x8] sm:$0xff]
  %v58 = vld [vmem:[%s1] sm:$0xff]
  %v59 = vld [vmem:[%s1 + $0x8] sm:$0xff]
  %v60 = vld [vmem:[%s2] sm:$0xff]
  %v61 = vld [vmem:[%s2 + $0x8] sm:$0xff]
  %v62 = vld [vmem:[%s2 + $0x10] sm:$0xff]
  %v63 = vld [vmem:[%s2 + $0x18] sm:$0xff]
  %v64 = vld [vmem:[%s3] sm:$0x1]
  %v66 = vlaneseq
  %v67 = vshrl.u32 %v66, 7
  %v68 = vsub.s32 0, %v67
  %v69 = vrot.slane %v64, %v68
  %vm71 = vcmask 261120
  %v73 = vsel %vm71, %v56, 0
  %v76 = vsel %vm71, %v57, 0
  %78 = vmatprep.subr.mxu0 0.0
  %79 = vmatpush1.msra.mxu0 %v60
  %80 = vmatprep.subr.mxu0 0.0
  %81 = vmatpush1.msra.mxu0 %v61
  %82 = vmatprep.subr.mxu0 0.0
  %83 = vmatpush1.msra.mxu0 %v62
  %84 = vmatprep.subr.mxu0 0.0
  %85 = vmatpush1.msra.mxu0 %v63
  %86 = vmatprep.subr.mxu0 0.0
  %87 = vmatpush1.msra.mxu0 0.0
  %88 = vmatprep.subr.mxu0 0.0
  %89 = vmatpush1.msra.mxu0 0.0
  %90 = vmatprep.subr.mxu0 0.0
  %91 = vmatpush1.msra.mxu0 0.0
  %92 = vmatprep.subr.mxu0 0.0
  %93 = vmatpush1.msra.mxu0 0.0
  %94 = vmatprep.subr.mxu0 0.0
  %95 = vmatpush1.msra.mxu0 0.0
  %96 = vmatprep.subr.mxu0 0.0
  %97 = vmatpush1.msra.mxu0 0.0
  %98 = vmatprep.subr.mxu0 0.0
  %99 = vmatpush1.msra.mxu0 0.0
  %100 = vmatprep.subr.mxu0 0.0
  %101 = vmatpush1.msra.mxu0 0.0
  %102 = vmatprep.subr.mxu0 0.0
  %103 = vmatpush1.msra.mxu0 0.0
  %104 = vmatprep.subr.mxu0 0.0
  %105 = vmatpush1.msra.mxu0 0.0
  %106 = vmatprep.subr.mxu0 0.0
  %107 = vmatpush1.msra.mxu0 0.0
  %108 = vmatprep.subr.mxu0 0.0
  %109 = vmatpush1.msra.mxu0 0.0
  %110 = vmatprep.subr.mxu0 0.0
  %111 = vmatpush1.msra.mxu0 0.0
  %112 = vmatprep.subr.mxu0 0.0
  %113 = vmatpush1.msra.mxu0 0.0
  %114 = vmatprep.subr.mxu0 0.0
  %115 = vmatpush1.msra.mxu0 0.0
  %116 = vmatprep.subr.mxu0 0.0
  %117 = vmatpush1.msra.mxu0 0.0
  %118 = vmatprep.subr.mxu0 0.0
  %119 = vmatpush1.msra.mxu0 0.0
  %120 = vmatprep.subr.mxu0 0.0
  %121 = vmatpush1.msra.mxu0 0.0
  %122 = vmatprep.subr.mxu0 0.0
  %123 = vmatpush1.msra.mxu0 0.0
  %124 = vmatprep.subr.mxu0 0.0
  %125 = vmatpush1.msra.mxu0 0.0
  %126 = vmatprep.subr.mxu0 0.0
  %127 = vmatpush1.msra.mxu0 0.0
  %128 = vmatprep.subr.mxu0 0.0
  %129 = vmatpush1.msra.mxu0 0.0
  %130 = vmatprep.subr.mxu0 0.0
  %131 = vmatpush1.msra.mxu0 0.0
  %132 = vmatprep.subr.mxu0 0.0
  %133 = vmatpush1.msra.mxu0 0.0
  %134 = vmatprep.subr.mxu0 0.0
  %135 = vmatpush1.msra.mxu0 0.0
  %136 = vmatprep.subr.mxu0 0.0
  %137 = vmatpush1.msra.mxu0 0.0
  %138 = vmatprep.subr.mxu0 0.0
  %139 = vmatpush1.msra.mxu0 0.0
  %140 = vmatprep.subr.mxu0 0.0
  %141 = vmatpush1.msra.mxu0 0.0
  %142 = vmatprep.mubr.f32.mxu0 0.0
  %143 = vmatmul.mubr.f32.gmra.mrb[0].mxu0 %v73
  %v144 = vpop.f32.mrb[0].mxu0
  %v145 = vadd.f32 %v69, %v144
  %v146 = vpop.f32.mrb[0].mxu0
  %147 = vmatprep.mubr.f32.mxu0 0.0
  %148 = vmatmul.mubr.f32.gmra.mrb[0].mxu0 %v76
  %v149 = vpop.f32.mrb[0].mxu0
  %v150 = vadd.f32 %v69, %v149
  %v151 = vpop.f32.mrb[0].mxu0
  %152 = vdwg.mxu0
  %v153 = vld [vmem:[%s4] sm:$0x1]
  %v154 = vld [vmem:[%s5] sm:$0x1]
  %vm155 = vcmask 523264
  %v156 = vsel %vm155, %v145, 0.0
  %157 = vadd.xlane.f32.xlu0 %v156
  %v158 = vpop.xlane.xlu0 %157
  %v159 = vsel %vm155, %v150, 0.0
  %160 = vadd.xlane.f32.xlu0 %v159
  %v161 = vpop.xlane.xlu0 %160
  %v162 = vrcp.pop 64.0
  %v163 = vmul.f32 %v158, %v162
  %v164 = vmul.f32 %v161, %v162
  %v165 = vsub.f32 %v145, %v163
  %v166 = vsub.f32 %v150, %v164
  %v167 = vmul.f32 %v165, %v165
  %v168 = vmul.f32 %v166, %v166
  %v169 = vsel %vm155, %v167, 0.0
  %170 = vadd.xlane.f32.xlu0 %v169
  %v171 = vpop.xlane.xlu0 %170
  %v172 = vsel %vm155, %v168, 0.0
  %173 = vadd.xlane.f32.xlu0 %v172
  %v174 = vpop.xlane.xlu0 %173
  %v175 = vmul.f32 %v171, %v162
  %v176 = vmul.f32 %v174, %v162
  %v177 = vadd.f32 %v175, 1e-05
  %v178 = vadd.f32 %v176, 1e-05
  %v179 = vrsqrt.pop %v177
  %v180 = vrsqrt.pop %v178
  %v181 = vmul.f32 %v165, %v179
  %v182 = vmul.f32 %v166, %v180
  %v184 = vlaneseq
  %v185 = vshrl.u32 %v184, 7
  %v186 = vsub.s32 0, %v185
  %v187 = vrot.slane %v153, %v186
  %v189 = vmul.f32 %v181, %v187
  %v190 = vmul.f32 %v182, %v187
  %v192 = vlaneseq
  %v193 = vshrl.u32 %v192, 7
  %v194 = vsub.s32 0, %v193
  %v195 = vrot.slane %v154, %v194
  %v197 = vadd.f32 %v189, %v195
  %v198 = vadd.f32 %v190, %v195
  %v199 = vmax.f32 %v197, 0.0
  %v200 = vmax.f32 %v198, 0.0
  %v201 = vld [vmem:[%s6] sm:$0xff]
  %v202 = vld [vmem:[%s6 + $0x8] sm:$0xff]
  %v203 = vld [vmem:[%s6 + $0x10] sm:$0xff]
  %v204 = vld [vmem:[%s6 + $0x18] sm:$0xff]
  %v205 = vld [vmem:[%s6 + $0x20] sm:$0xff]
  %v206 = vld [vmem:[%s6 + $0x28] sm:$0xff]
  %v207 = vld [vmem:[%s6 + $0x30] sm:$0xff]
  %v208 = vld [vmem:[%s6 + $0x38] sm:$0xff]
  %v210 = vsel %vm155, %v199, 0
  %v213 = vsel %vm155, %v200, 0
  %215 = vmatprep.subr.mxu0 0.0
  %216 = vmatpush1.msra.mxu0 %v201
  %217 = vmatprep.subr.mxu0 0.0
  %218 = vmatpush1.msra.mxu0 %v202
  %219 = vmatprep.subr.mxu0 0.0
  %220 = vmatpush1.msra.mxu0 %v203
  %221 = vmatprep.subr.mxu0 0.0
  %222 = vmatpush1.msra.mxu0 %v204
  %223 = vmatprep.subr.mxu0 0.0
  %224 = vmatpush1.msra.mxu0 %v205
  %225 = vmatprep.subr.mxu0 0.0
  %226 = vmatpush1.msra.mxu0 %v206
  %227 = vmatprep.subr.mxu0 0.0
  %228 = vmatpush1.msra.mxu0 %v207
  %229 = vmatprep.subr.mxu0 0.0
  %230 = vmatpush1.msra.mxu0 %v208
  %231 = vmatprep.subr.mxu0 0.0
  %232 = vmatpush1.msra.mxu0 0.0
  %233 = vmatprep.subr.mxu0 0.0
  %234 = vmatpush1.msra.mxu0 0.0
  %235 = vmatprep.subr.mxu0 0.0
  %236 = vmatpush1.msra.mxu0 0.0
  %237 = vmatprep.subr.mxu0 0.0
  %238 = vmatpush1.msra.mxu0 0.0
  %239 = vmatprep.subr.mxu0 0.0
  %240 = vmatpush1.msra.mxu0 0.0
  %241 = vmatprep.subr.mxu0 0.0
  %242 = vmatpush1.msra.mxu0 0.0
  %243 = vmatprep.subr.mxu0 0.0
  %244 = vmatpush1.msra.mxu0 0.0
  %245 = vmatprep.subr.mxu0 0.0
  %246 = vmatpush1.msra.mxu0 0.0
  %247 = vmatprep.subr.mxu0 0.0
  %248 = vmatpush1.msra.mxu0 0.0
  %249 = vmatprep.subr.mxu0 0.0
  %250 = vmatpush1.msra.mxu0 0.0
  %251 = vmatprep.subr.mxu0 0.0
  %252 = vmatpush1.msra.mxu0 0.0
  %253 = vmatprep.subr.mxu0 0.0
  %254 = vmatpush1.msra.mxu0 0.0
  %255 = vmatprep.subr.mxu0 0.0
  %256 = vmatpush1.msra.mxu0 0.0
  %257 = vmatprep.subr.mxu0 0.0
  %258 = vmatpush1.msra.mxu0 0.0
  %259 = vmatprep.subr.mxu0 0.0
  %260 = vmatpush1.msra.mxu0 0.0
  %261 = vmatprep.subr.mxu0 0.0
  %262 = vmatpush1.msra.mxu0 0.0
  %263 = vmatprep.subr.mxu0 0.0
  %264 = vmatpush1.msra.mxu0 0.0
  %265 = vmatprep.subr.mxu0 0.0
  %266 = vmatpush1.msra.mxu0 0.0
  %267 = vmatprep.subr.mxu0 0.0
  %268 = vmatpush1.msra.mxu0 0.0
  %269 = vmatprep.subr.mxu0 0.0
  %270 = vmatpush1.msra.mxu0 0.0
  %271 = vmatprep.subr.mxu0 0.0
  %272 = vmatpush1.msra.mxu0 0.0
  %273 = vmatprep.subr.mxu0 0.0
  %274 = vmatpush1.msra.mxu0 0.0
  %275 = vmatprep.subr.mxu0 0.0
  %276 = vmatpush1.msra.mxu0 0.0
  %277 = vmatprep.subr.mxu0 0.0
  %278 = vmatpush1.msra.mxu0 0.0
  %279 = vmatprep.mubr.f32.mxu0 0.0
  %280 = vmatmul.mubr.f32.gmra.mrb[0].mxu0 %v210
  %v281 = vpop.f32.mrb[0].mxu0
  %v282 = vadd.f32 0.0, %v281
  %v283 = vpop.f32.mrb[0].mxu0
  %284 = vmatprep.mubr.f32.mxu0 0.0
  %285 = vmatmul.mubr.f32.gmra.mrb[0].mxu0 %v213
  %v286 = vpop.f32.mrb[0].mxu0
  %v287 = vadd.f32 0.0, %v286
  %v288 = vpop.f32.mrb[0].mxu0
  %289 = vdwg.mxu0
  %v290 = vld [vmem:[#allocation5] sm:$0x1]
  %v292 = vlaneseq
  %v293 = vshrl.u32 %v292, 7
  %v294 = vsub.s32 0, %v293
  %v295 = vrot.slane %v290, %v294
  %v297 = vadd.f32 %v282, %v295
  %v298 = vadd.f32 %v287, %v295
  %v299 = vlaneseq
  %v300 = vand.u32 %v299, 127
  %301 = vset.pattern.permute.xlu0 0
  %302 = vperm.xlu0 %301, %v58
  %v303 = vpop.permute.xlu0 %302
  %304 = vset.pattern.permute.xlu0 0
  %305 = vperm.xlu0 %304, %v59
  %v306 = vpop.permute.xlu0 %305
  %vm307 = vcmp.eq.s32.totalorder %v300, %v303
  %vm308 = vcmp.eq.s32.totalorder %v300, %v306
  %v309 = vsel %vm307, 1, 0
  %v310 = vsel %vm308, 1, 0
  %v311 = vcvt.s32.f32 %v309
  %v312 = vcvt.s32.f32 %v310
  %314 = vset.pattern.permute.xlu0 0
  %315 = vperm.xlu0 %314, %v297
  %v316 = vpop.permute.xlu0 %315
  %319 = vset.pattern.permute.xlu0 0
  %320 = vperm.xlu0 %319, %v298
  %v321 = vpop.permute.xlu0 %320
  %v323 = vsel %vm307, %v316, -1e+30
  %v324 = vsel %vm308, %v321, -1e+30
  %v325 = vmax.f32 %v323, %v324
  %v326 = vrot.slane %v325, 4
  %v327 = vmax.f32 %v325, %v326
  %v328 = vrot.slane %v327, 2
  %v329 = vmax.f32 %v327, %v328
  %v330 = vrot.slane %v329, 1
  %v331 = vmax.f32 %v329, %v330
  %v332 = vld [vmem:[#allocation2] sm:$0x1]
  %v333 = vmax.f32 %v332, %v331
  %v334 = vsub.f32 %v332, %v333
  %v335 = vmul.f32 %v334, 1.442695
  %v336 = vpow.pop %v335
  %337 = vst [vmem:[#allocation2] sm:$0x1] %v333
  %v339 = vlaneseq
  %v340 = vshrl.u32 %v339, 7
  %v341 = vsub.s32 0, %v340
  %v342 = vrot.slane %v333, %v341
  %v344 = vmul.f32 %v311, %v342
  %v345 = vmul.f32 %v312, %v342
  %346 = vadd.xlane.f32.xlu0 %v344
  %v347 = vpop.xlane.xlu0 %346
  %348 = vadd.xlane.f32.xlu0 %v345
  %v349 = vpop.xlane.xlu0 %348
  %v350 = vsub.f32 %v297, %v347
  %v351 = vsub.f32 %v298, %v349
  %v352 = vmin.f32 %v350, 0.0
  %v353 = vmin.f32 %v351, 0.0
  %v354 = vmul.f32 %v352, 1.442695
  %v355 = vpow.pop %v354
  %v356 = vmul.f32 %v353, 1.442695
  %v357 = vpow.pop %v356
  %359 = vset.pattern.permute.xlu0 0
  %360 = vperm.xlu0 %359, %v355
  %v361 = vpop.permute.xlu0 %360
  %364 = vset.pattern.permute.xlu0 0
  %365 = vperm.xlu0 %364, %v357
  %v366 = vpop.permute.xlu0 %365
  %v368 = vmul.f32 %v311, %v361
  %v369 = vmul.f32 %v312, %v366
  %v370 = vld [vmem:[#allocation3] sm:$0x1]
  %v371 = vmul.f32 %v336, %v370
  %v372 = vadd.f32 %v368, %v369
  %v373 = vrot.slane %v372, 4
  %v374 = vadd.f32 %v372, %v373
  %v375 = vrot.slane %v374, 2
  %v376 = vadd.f32 %v374, %v375
  %v377 = vrot.slane %v376, 1
  %v378 = vadd.f32 %v376, %v377
  %v379 = vadd.f32 %v371, %v378
  %380 = vst [vmem:[#allocation3] sm:$0x1] %v379
  %381 = vxpose.xlu0.b32.start [1/16] %v368, 128
  %382 = vxpose.xlu0.b32.cont [2/16] %v369, 128
  %383 = vxpose.xlu0.b32.cont [3/16] 0.0, 128
  %384 = vxpose.xlu0.b32.cont [4/16] 0.0, 128
  %385 = vxpose.xlu0.b32.cont [5/16] 0.0, 128
  %386 = vxpose.xlu0.b32.cont [6/16] 0.0, 128
  %387 = vxpose.xlu0.b32.cont [7/16] 0.0, 128
  %388 = vxpose.xlu0.b32.cont [8/16] 0.0, 128
  %389 = vxpose.xlu0.b32.cont [9/16] 0.0, 128
  %390 = vxpose.xlu0.b32.cont [10/16] 0.0, 128
  %391 = vxpose.xlu0.b32.cont [11/16] 0.0, 128
  %392 = vxpose.xlu0.b32.cont [12/16] 0.0, 128
  %393 = vxpose.xlu0.b32.cont [13/16] 0.0, 128
  %394 = vxpose.xlu0.b32.cont [14/16] 0.0, 128
  %395 = vxpose.xlu0.b32.cont [15/16] 0.0, 128
  %396 = vxpose.xlu0.b32.end [16/16] 0.0, 128
  %v397 = vpop.trf.xlu0
  %v398 = vpop.trf.xlu0
  %v399 = vpop.trf.xlu0
  %v400 = vpop.trf.xlu0
  %v401 = vpop.trf.xlu0
  %v402 = vpop.trf.xlu0
  %v403 = vpop.trf.xlu0
  %v404 = vpop.trf.xlu0
  %v405 = vpop.trf.xlu0
  %v406 = vpop.trf.xlu0
  %v407 = vpop.trf.xlu0
  %v408 = vpop.trf.xlu0
  %v409 = vpop.trf.xlu0
  %v410 = vpop.trf.xlu0
  %v411 = vpop.trf.xlu0
  %v412 = vpop.trf.xlu0
  %vm413 = vcmask 130048
  %v415 = vsel %vm413, %v397, 0
  %v418 = vsel %vm413, %v398, 0
  %v421 = vsel %vm413, %v399, 0
  %v424 = vsel %vm413, %v400, 0
  %v427 = vsel %vm413, %v401, 0
  %v430 = vsel %vm413, %v402, 0
  %v433 = vsel %vm413, %v403, 0
  %v436 = vsel %vm413, %v404, 0
  %v439 = vsel %vm413, %v405, 0
  %v442 = vsel %vm413, %v406, 0
  %v445 = vsel %vm413, %v407, 0
  %v448 = vsel %vm413, %v408, 0
  %v451 = vsel %vm413, %v409, 0
  %v454 = vsel %vm413, %v410, 0
  %v457 = vsel %vm413, %v411, 0
  %v460 = vsel %vm413, %v412, 0
  %462 = vmatprep.subr.mxu0 0.0
  %463 = vmatpush1.msra.mxu0 %v56
  %464 = vmatprep.subr.mxu0 0.0
  %465 = vmatpush1.msra.mxu0 %v57
  %466 = vmatprep.subr.mxu0 0.0
  %467 = vmatpush1.msra.mxu0 0.0
  %468 = vmatprep.subr.mxu0 0.0
  %469 = vmatpush1.msra.mxu0 0.0
  %470 = vmatprep.subr.mxu0 0.0
  %471 = vmatpush1.msra.mxu0 0.0
  %472 = vmatprep.subr.mxu0 0.0
  %473 = vmatpush1.msra.mxu0 0.0
  %474 = vmatprep.subr.mxu0 0.0
  %475 = vmatpush1.msra.mxu0 0.0
  %476 = vmatprep.subr.mxu0 0.0
  %477 = vmatpush1.msra.mxu0 0.0
  %478 = vmatprep.subr.mxu0 0.0
  %479 = vmatpush1.msra.mxu0 0.0
  %480 = vmatprep.subr.mxu0 0.0
  %481 = vmatpush1.msra.mxu0 0.0
  %482 = vmatprep.subr.mxu0 0.0
  %483 = vmatpush1.msra.mxu0 0.0
  %484 = vmatprep.subr.mxu0 0.0
  %485 = vmatpush1.msra.mxu0 0.0
  %486 = vmatprep.subr.mxu0 0.0
  %487 = vmatpush1.msra.mxu0 0.0
  %488 = vmatprep.subr.mxu0 0.0
  %489 = vmatpush1.msra.mxu0 0.0
  %490 = vmatprep.subr.mxu0 0.0
  %491 = vmatpush1.msra.mxu0 0.0
  %492 = vmatprep.subr.mxu0 0.0
  %493 = vmatpush1.msra.mxu0 0.0
  %494 = vmatprep.subr.mxu0 0.0
  %495 = vmatpush1.msra.mxu0 0.0
  %496 = vmatprep.subr.mxu0 0.0
  %497 = vmatpush1.msra.mxu0 0.0
  %498 = vmatprep.subr.mxu0 0.0
  %499 = vmatpush1.msra.mxu0 0.0
  %500 = vmatprep.subr.mxu0 0.0
  %501 = vmatpush1.msra.mxu0 0.0
  %502 = vmatprep.subr.mxu0 0.0
  %503 = vmatpush1.msra.mxu0 0.0
  %504 = vmatprep.subr.mxu0 0.0
  %505 = vmatpush1.msra.mxu0 0.0
  %506 = vmatprep.subr.mxu0 0.0
  %507 = vmatpush1.msra.mxu0 0.0
  %508 = vmatprep.subr.mxu0 0.0
  %509 = vmatpush1.msra.mxu0 0.0
  %510 = vmatprep.subr.mxu0 0.0
  %511 = vmatpush1.msra.mxu0 0.0
  %512 = vmatprep.subr.mxu0 0.0
  %513 = vmatpush1.msra.mxu0 0.0
  %514 = vmatprep.subr.mxu0 0.0
  %515 = vmatpush1.msra.mxu0 0.0
  %516 = vmatprep.subr.mxu0 0.0
  %517 = vmatpush1.msra.mxu0 0.0
  %518 = vmatprep.subr.mxu0 0.0
  %519 = vmatpush1.msra.mxu0 0.0
  %520 = vmatprep.subr.mxu0 0.0
  %521 = vmatpush1.msra.mxu0 0.0
  %522 = vmatprep.subr.mxu0 0.0
  %523 = vmatpush1.msra.mxu0 0.0
  %524 = vmatprep.subr.mxu0 0.0
  %525 = vmatpush1.msra.mxu0 0.0
  %526 = vmatprep.mubr.f32.mxu0 0.0
  %527 = vmatmul.mubr.f32.gmra.mrb[0].mxu0 %v415
  %v528 = vpop.f32.mrb[0].mxu0
  %v529 = vadd.f32 0.0, %v528
  %v530 = vpop.f32.mrb[0].mxu0
  %531 = vmatprep.mubr.f32.mxu0 0.0
  %532 = vmatmul.mubr.f32.gmra.mrb[0].mxu0 %v418
  %v533 = vpop.f32.mrb[0].mxu0
  %v534 = vadd.f32 0.0, %v533
  %v535 = vpop.f32.mrb[0].mxu0
  %536 = vmatprep.mubr.f32.mxu0 0.0
  %537 = vmatmul.mubr.f32.gmra.mrb[0].mxu0 %v421
  %v538 = vpop.f32.mrb[0].mxu0
  %v539 = vadd.f32 0.0, %v538
  %v540 = vpop.f32.mrb[0].mxu0
  %541 = vmatprep.mubr.f32.mxu0 0.0
  %542 = vmatmul.mubr.f32.gmra.mrb[0].mxu0 %v424
  %v543 = vpop.f32.mrb[0].mxu0
  %v544 = vadd.f32 0.0, %v543
  %v545 = vpop.f32.mrb[0].mxu0
  %546 = vmatprep.mubr.f32.mxu0 0.0
  %547 = vmatmul.mubr.f32.gmra.mrb[0].mxu0 %v427
  %v548 = vpop.f32.mrb[0].mxu0
  %v549 = vadd.f32 0.0, %v548
  %v550 = vpop.f32.mrb[0].mxu0
  %551 = vmatprep.mubr.f32.mxu0 0.0
  %552 = vmatmul.mubr.f32.gmra.mrb[0].mxu0 %v430
  %v553 = vpop.f32.mrb[0].mxu0
  %v554 = vadd.f32 0.0, %v553
  %v555 = vpop.f32.mrb[0].mxu0
  %556 = vmatprep.mubr.f32.mxu0 0.0
  %557 = vmatmul.mubr.f32.gmra.mrb[0].mxu0 %v433
  %v558 = vpop.f32.mrb[0].mxu0
  %v559 = vadd.f32 0.0, %v558
  %v560 = vpop.f32.mrb[0].mxu0
  %561 = vmatprep.mubr.f32.mxu0 0.0
  %562 = vmatmul.mubr.f32.gmra.mrb[0].mxu0 %v436
  %v563 = vpop.f32.mrb[0].mxu0
  %v564 = vadd.f32 0.0, %v563
  %v565 = vpop.f32.mrb[0].mxu0
  %566 = vmatprep.mubr.f32.mxu0 0.0
  %567 = vmatmul.mubr.f32.gmra.mrb[0].mxu0 %v439
  %v568 = vpop.f32.mrb[0].mxu0
  %v569 = vadd.f32 0.0, %v568
  %v570 = vpop.f32.mrb[0].mxu0
  %571 = vmatprep.mubr.f32.mxu0 0.0
  %572 = vmatmul.mubr.f32.gmra.mrb[0].mxu0 %v442
  %v573 = vpop.f32.mrb[0].mxu0
  %v574 = vadd.f32 0.0, %v573
  %v575 = vpop.f32.mrb[0].mxu0
  %576 = vmatprep.mubr.f32.mxu0 0.0
  %577 = vmatmul.mubr.f32.gmra.mrb[0].mxu0 %v445
  %v578 = vpop.f32.mrb[0].mxu0
  %v579 = vadd.f32 0.0, %v578
  %v580 = vpop.f32.mrb[0].mxu0
  %581 = vmatprep.mubr.f32.mxu0 0.0
  %582 = vmatmul.mubr.f32.gmra.mrb[0].mxu0 %v448
  %v583 = vpop.f32.mrb[0].mxu0
  %v584 = vadd.f32 0.0, %v583
  %v585 = vpop.f32.mrb[0].mxu0
  %586 = vmatprep.mubr.f32.mxu0 0.0
  %587 = vmatmul.mubr.f32.gmra.mrb[0].mxu0 %v451
  %v588 = vpop.f32.mrb[0].mxu0
  %v589 = vadd.f32 0.0, %v588
  %v590 = vpop.f32.mrb[0].mxu0
  %591 = vmatprep.mubr.f32.mxu0 0.0
  %592 = vmatmul.mubr.f32.gmra.mrb[0].mxu0 %v454
  %v593 = vpop.f32.mrb[0].mxu0
  %v594 = vadd.f32 0.0, %v593
  %v595 = vpop.f32.mrb[0].mxu0
  %596 = vmatprep.mubr.f32.mxu0 0.0
  %597 = vmatmul.mubr.f32.gmra.mrb[0].mxu0 %v457
  %v598 = vpop.f32.mrb[0].mxu0
  %v599 = vadd.f32 0.0, %v598
  %v600 = vpop.f32.mrb[0].mxu0
  %601 = vmatprep.mubr.f32.mxu0 0.0
  %602 = vmatmul.mubr.f32.gmra.mrb[0].mxu0 %v460
  %v603 = vpop.f32.mrb[0].mxu0
  %v604 = vadd.f32 0.0, %v603
  %v605 = vpop.f32.mrb[0].mxu0
  %606 = vdwg.mxu0
  %607 = vxpose.xlu0.b32.start [1/16] %v336, 128
  %608 = vxpose.xlu0.b32.cont [2/16] 0.0, 128
  %609 = vxpose.xlu0.b32.cont [3/16] 0.0, 128
  %610 = vxpose.xlu0.b32.cont [4/16] 0.0, 128
  %611 = vxpose.xlu0.b32.cont [5/16] 0.0, 128
  %612 = vxpose.xlu0.b32.cont [6/16] 0.0, 128
  %613 = vxpose.xlu0.b32.cont [7/16] 0.0, 128
  %614 = vxpose.xlu0.b32.cont [8/16] 0.0, 128
  %615 = vxpose.xlu0.b32.cont [9/16] 0.0, 128
  %616 = vxpose.xlu0.b32.cont [10/16] 0.0, 128
  %617 = vxpose.xlu0.b32.cont [11/16] 0.0, 128
  %618 = vxpose.xlu0.b32.cont [12/16] 0.0, 128
  %619 = vxpose.xlu0.b32.cont [13/16] 0.0, 128
  %620 = vxpose.xlu0.b32.cont [14/16] 0.0, 128
  %621 = vxpose.xlu0.b32.cont [15/16] 0.0, 128
  %622 = vxpose.xlu0.b32.end [16/16] 0.0, 128
  %v623 = vpop.trf.xlu0
  %v624 = vpop.trf.xlu0
  %v625 = vpop.trf.xlu0
  %v626 = vpop.trf.xlu0
  %v627 = vpop.trf.xlu0
  %v628 = vpop.trf.xlu0
  %v629 = vpop.trf.xlu0
  %v630 = vpop.trf.xlu0
  %v631 = vpop.trf.xlu0
  %v632 = vpop.trf.xlu0
  %v633 = vpop.trf.xlu0
  %v634 = vpop.trf.xlu0
  %v635 = vpop.trf.xlu0
  %v636 = vpop.trf.xlu0
  %v637 = vpop.trf.xlu0
  %v638 = vpop.trf.xlu0
  %v639 = vld [vmem:[#allocation4] sm:$0xff]
  %v640 = vld [vmem:[#allocation4 + $0x8] sm:$0xff]
  %v641 = vld [vmem:[#allocation4 + $0x10] sm:$0xff]
  %v642 = vld [vmem:[#allocation4 + $0x18] sm:$0xff]
  %v643 = vld [vmem:[#allocation4 + $0x20] sm:$0xff]
  %v644 = vld [vmem:[#allocation4 + $0x28] sm:$0xff]
  %v645 = vld [vmem:[#allocation4 + $0x30] sm:$0xff]
  %v646 = vld [vmem:[#allocation4 + $0x38] sm:$0xff]
  %v647 = vld [vmem:[#allocation4 + $0x40] sm:$0xff]
  %v648 = vld [vmem:[#allocation4 + $0x48] sm:$0xff]
  %v649 = vld [vmem:[#allocation4 + $0x50] sm:$0xff]
  %v650 = vld [vmem:[#allocation4 + $0x58] sm:$0xff]
  %v651 = vld [vmem:[#allocation4 + $0x60] sm:$0xff]
  %v652 = vld [vmem:[#allocation4 + $0x68] sm:$0xff]
  %v653 = vld [vmem:[#allocation4 + $0x70] sm:$0xff]
  %v654 = vld [vmem:[#allocation4 + $0x78] sm:$0xff]
  %656 = vset.pattern.permute.xlu0 0
  %657 = vperm.xlu0 %656, %v623
  %v658 = vpop.permute.xlu0 %657
  %661 = vset.pattern.permute.xlu0 0
  %662 = vperm.xlu0 %661, %v624
  %v663 = vpop.permute.xlu0 %662
  %666 = vset.pattern.permute.xlu0 0
  %667 = vperm.xlu0 %666, %v625
  %v668 = vpop.permute.xlu0 %667
  %671 = vset.pattern.permute.xlu0 0
  %672 = vperm.xlu0 %671, %v626
  %v673 = vpop.permute.xlu0 %672
  %676 = vset.pattern.permute.xlu0 0
  %677 = vperm.xlu0 %676, %v627
  %v678 = vpop.permute.xlu0 %677
  %681 = vset.pattern.permute.xlu0 0
  %682 = vperm.xlu0 %681, %v628
  %v683 = vpop.permute.xlu0 %682
  %686 = vset.pattern.permute.xlu0 0
  %687 = vperm.xlu0 %686, %v629
  %v688 = vpop.permute.xlu0 %687
  %691 = vset.pattern.permute.xlu0 0
  %692 = vperm.xlu0 %691, %v630
  %v693 = vpop.permute.xlu0 %692
  %696 = vset.pattern.permute.xlu0 0
  %697 = vperm.xlu0 %696, %v631
  %v698 = vpop.permute.xlu0 %697
  %701 = vset.pattern.permute.xlu0 0
  %702 = vperm.xlu0 %701, %v632
  %v703 = vpop.permute.xlu0 %702
  %706 = vset.pattern.permute.xlu0 0
  %707 = vperm.xlu0 %706, %v633
  %v708 = vpop.permute.xlu0 %707
  %711 = vset.pattern.permute.xlu0 0
  %712 = vperm.xlu0 %711, %v634
  %v713 = vpop.permute.xlu0 %712
  %716 = vset.pattern.permute.xlu0 0
  %717 = vperm.xlu0 %716, %v635
  %v718 = vpop.permute.xlu0 %717
  %721 = vset.pattern.permute.xlu0 0
  %722 = vperm.xlu0 %721, %v636
  %v723 = vpop.permute.xlu0 %722
  %726 = vset.pattern.permute.xlu0 0
  %727 = vperm.xlu0 %726, %v637
  %v728 = vpop.permute.xlu0 %727
  %731 = vset.pattern.permute.xlu0 0
  %732 = vperm.xlu0 %731, %v638
  %v733 = vpop.permute.xlu0 %732
  %v735 = vmul.f32 %v658, %v639
  %v736 = vmul.f32 %v663, %v640
  %v737 = vmul.f32 %v668, %v641
  %v738 = vmul.f32 %v673, %v642
  %v739 = vmul.f32 %v678, %v643
  %v740 = vmul.f32 %v683, %v644
  %v741 = vmul.f32 %v688, %v645
  %v742 = vmul.f32 %v693, %v646
  %v743 = vmul.f32 %v698, %v647
  %v744 = vmul.f32 %v703, %v648
  %v745 = vmul.f32 %v708, %v649
  %v746 = vmul.f32 %v713, %v650
  %v747 = vmul.f32 %v718, %v651
  %v748 = vmul.f32 %v723, %v652
  %v749 = vmul.f32 %v728, %v653
  %v750 = vmul.f32 %v733, %v654
  %v751 = vadd.f32 %v735, %v529
  %v752 = vadd.f32 %v736, %v534
  %v753 = vadd.f32 %v737, %v539
  %v754 = vadd.f32 %v738, %v544
  %v755 = vadd.f32 %v739, %v549
  %v756 = vadd.f32 %v740, %v554
  %v757 = vadd.f32 %v741, %v559
  %v758 = vadd.f32 %v742, %v564
  %v759 = vadd.f32 %v743, %v569
  %v760 = vadd.f32 %v744, %v574
  %v761 = vadd.f32 %v745, %v579
  %v762 = vadd.f32 %v746, %v584
  %v763 = vadd.f32 %v747, %v589
  %v764 = vadd.f32 %v748, %v594
  %v765 = vadd.f32 %v749, %v599
  %v766 = vadd.f32 %v750, %v604
  %767 = vst.msk [vmem:[#allocation4] sm:$0xff] %vm71, %v751
  %768 = vst.msk [vmem:[#allocation4 + $0x8] sm:$0xff] %vm71, %v752
  %769 = vst.msk [vmem:[#allocation4 + $0x10] sm:$0xff] %vm71, %v753
  %770 = vst.msk [vmem:[#allocation4 + $0x18] sm:$0xff] %vm71, %v754
  %771 = vst.msk [vmem:[#allocation4 + $0x20] sm:$0xff] %vm71, %v755
  %772 = vst.msk [vmem:[#allocation4 + $0x28] sm:$0xff] %vm71, %v756
  %773 = vst.msk [vmem:[#allocation4 + $0x30] sm:$0xff] %vm71, %v757
  %774 = vst.msk [vmem:[#allocation4 + $0x38] sm:$0xff] %vm71, %v758
  %775 = vst.msk [vmem:[#allocation4 + $0x40] sm:$0xff] %vm71, %v759
  %776 = vst.msk [vmem:[#allocation4 + $0x48] sm:$0xff] %vm71, %v760
  %777 = vst.msk [vmem:[#allocation4 + $0x50] sm:$0xff] %vm71, %v761
  %778 = vst.msk [vmem:[#allocation4 + $0x58] sm:$0xff] %vm71, %v762
  %779 = vst.msk [vmem:[#allocation4 + $0x60] sm:$0xff] %vm71, %v763
  %780 = vst.msk [vmem:[#allocation4 + $0x68] sm:$0xff] %vm71, %v764
  %781 = vst.msk [vmem:[#allocation4 + $0x70] sm:$0xff] %vm71, %v765
  %782 = vst.msk [vmem:[#allocation4 + $0x78] sm:$0xff] %vm71, %v766
  // Predicated region
  $region38: #{cls_decoder_forward.2} parent=0 // pred_check
    %p783 = pneg %p33
  $region39: #{cls_decoder_forward.2} parent=0 // pred_check_branch
    %785 = sbr.rel (%p783) target = $region41
  $region40: #{cls_decoder_forward.2} parent=0 // pred_region
    %v786 = vld [vmem:[#allocation4] sm:$0xff]
    %v787 = vld [vmem:[#allocation4 + $0x8] sm:$0xff]
    %v788 = vld [vmem:[#allocation4 + $0x10] sm:$0xff]
    %v789 = vld [vmem:[#allocation4 + $0x18] sm:$0xff]
    %v790 = vld [vmem:[#allocation4 + $0x20] sm:$0xff]
    %v791 = vld [vmem:[#allocation4 + $0x28] sm:$0xff]
    %v792 = vld [vmem:[#allocation4 + $0x30] sm:$0xff]
    %v793 = vld [vmem:[#allocation4 + $0x38] sm:$0xff]
    %v794 = vld [vmem:[#allocation4 + $0x40] sm:$0xff]
    %v795 = vld [vmem:[#allocation4 + $0x48] sm:$0xff]
    %v796 = vld [vmem:[#allocation4 + $0x50] sm:$0xff]
    %v797 = vld [vmem:[#allocation4 + $0x58] sm:$0xff]
    %v798 = vld [vmem:[#allocation4 + $0x60] sm:$0xff]
    %v799 = vld [vmem:[#allocation4 + $0x68] sm:$0xff]
    %v800 = vld [vmem:[#allocation4 + $0x70] sm:$0xff]
    %v801 = vld [vmem:[#allocation4 + $0x78] sm:$0xff]
    %802 = vst.msk [vmem:[%s8] sm:$0xff] %vm71, %v786
    %803 = vst.msk [vmem:[%s8 + $0x8] sm:$0xff] %vm71, %v787
    %804 = vst.msk [vmem:[%s8 + $0x10] sm:$0xff] %vm71, %v788
    %805 = vst.msk [vmem:[%s8 + $0x18] sm:$0xff] %vm71, %v789
    %806 = vst.msk [vmem:[%s8 + $0x20] sm:$0xff] %vm71, %v790
    %807 = vst.msk [vmem:[%s8 + $0x28] sm:$0xff] %vm71, %v791
    %808 = vst.msk [vmem:[%s8 + $0x30] sm:$0xff] %vm71, %v792
    %809 = vst.msk [vmem:[%s8 + $0x38] sm:$0xff] %vm71, %v793
    %810 = vst.msk [vmem:[%s8 + $0x40] sm:$0xff] %vm71, %v794
    %811 = vst.msk [vmem:[%s8 + $0x48] sm:$0xff] %vm71, %v795
    %812 = vst.msk [vmem:[%s8 + $0x50] sm:$0xff] %vm71, %v796
    %813 = vst.msk [vmem:[%s8 + $0x58] sm:$0xff] %vm71, %v797
    %814 = vst.msk [vmem:[%s8 + $0x60] sm:$0xff] %vm71, %v798
    %815 = vst.msk [vmem:[%s8 + $0x68] sm:$0xff] %vm71, %v799
    %816 = vst.msk [vmem:[%s8 + $0x70] sm:$0xff] %vm71, %v800
    %817 = vst.msk [vmem:[%s8 + $0x78] sm:$0xff] %vm71, %v801
    %v818 = vld [vmem:[#allocation3] sm:$0x1]
    %819 = vst [vmem:[%s9] sm:$0x1] %v818
  $region41: #{cls_decoder_forward.2} parent=0 // pred_fallthru
    _
  // Predicated region
  $region42: #{cls_decoder_forward.2} parent=0 // pred_check
    _
  $region43: #{cls_decoder_forward.2} parent=0 // pred_check_branch
    %821 = sbr.rel (0) target = $region45
  $region44: #{cls_decoder_forward.2} parent=0 // pred_region
    _
  $region45: #{cls_decoder_forward.2} parent=0 // pred_fallthru
    _
  // Predicated region
  $region46: #{cls_decoder_forward.2} parent=0 // pred_check
    _
  $region47: #{cls_decoder_forward.2} parent=0 // pred_check_branch
    %823 = sbr.rel (0) target = $region49
  $region48: #{cls_decoder_forward.2} parent=0 // pred_region
    _
  $region49: #{cls_decoder_forward.2} parent=0 // pred_fallthru
    _
  // Predicated region
  $region50: #{cls_decoder_forward.2} parent=0 // pred_check
    _
  $region51: #{cls_decoder_forward.2} parent=0 // pred_check_branch
    %825 = sbr.rel (0) target = $region53
  $region52: #{cls_decoder_forward.2} parent=0 // pred_region
    _
  $region53: #{cls_decoder_forward.2} parent=0 // pred_fallthru
    _
  // Predicated region
  $region54: #{cls_decoder_forward.2} parent=0 // pred_check
    _
  $region55: #{cls_decoder_forward.2} parent=0 // pred_check_branch
    %827 = sbr.rel (0) target = $region57
  $region56: #{cls_decoder_forward.2} parent=0 // pred_region
    _
  $region57: #{cls_decoder_forward.2} parent=0 // pred_fallthru
    _

// kernel: cls_decoder_forward.3
$region0: #{cls_decoder_forward.3}
  #allocation0 [shape = 'u32[]', space=smem, size = 0x4, offset = 0x4, fixed_abs, tag = 'smem constant byte address 0x4 - core index']
  #allocation1 [shape = 'u32[144,128]{1,0:T(1,128)}', space=vmem, size = 0x12000, scoped, tag = 'internal scratch']
  %s0 = inlined_call_operand.vmem [shape: f32[128,32], index: 0, kind: input, shape index: {}]
  %s1 = inlined_call_operand.vmem [shape: f32[1,128], index: 1, kind: input, shape index: {}]
  %s2 = inlined_call_operand.vmem [shape: f32[1,32], index: 2, kind: input, shape index: {}]
  %s3 = inlined_call_operand.vmem [shape: f32[1,32], index: 3, kind: input, shape index: {}]
  %s4 = inlined_call_operand.vmem [shape: f32[32,32], index: 4, kind: input, shape index: {}]
  %s5 = inlined_call_operand.vmem [shape: f32[1,32], index: 5, kind: input, shape index: {}]
  %s6 = inlined_call_operand.vmem [shape: f32[1,32], index: 6, kind: input, shape index: {}]
  %s7 = inlined_call_operand.vmem [shape: f32[1,32], index: 7, kind: input, shape index: {}]
  %s8 = inlined_call_operand.vmem [shape: f32[32,128], index: 8, kind: input, shape index: {}]
  %s9 = inlined_call_operand.vmem [shape: f32[1,128], index: 9, kind: input, shape index: {}]
  %s10 = inlined_call_operand.vmem [shape: f32[128,128], index: 10, kind: output, shape index: {}]
  %s11 = sld [smem:[#allocation0]]
  $region50: #{cls_decoder_forward.3} parent=0
    _
  %s13 = ssub.s32 1, %s11
  %s14 = scalar_select 0, %s13, %s11
  // Predicated region
  $region2: #{cls_decoder_forward.3} parent=0 // pred_check
    _
  $region3: #{cls_decoder_forward.3} parent=0 // pred_check_branch
    %16 = sbr.rel (0) target = $region5
  $region4: #{cls_decoder_forward.3} parent=0 // pred_region
    _
  $region5: #{cls_decoder_forward.3} parent=0 // pred_fallthru
    _
  // Predicated region
  $region6: #{cls_decoder_forward.3} parent=0 // pred_check
    _
  $region7: #{cls_decoder_forward.3} parent=0 // pred_check_branch
    %18 = sbr.rel (0) target = $region9
  $region8: #{cls_decoder_forward.3} parent=0 // pred_region
    _
  $region9: #{cls_decoder_forward.3} parent=0 // pred_fallthru
    _
  // Predicated region
  $region10: #{cls_decoder_forward.3} parent=0 // pred_check
    _
  $region11: #{cls_decoder_forward.3} parent=0 // pred_check_branch
    %20 = sbr.rel (0) target = $region13
  $region12: #{cls_decoder_forward.3} parent=0 // pred_region
    _
  $region13: #{cls_decoder_forward.3} parent=0 // pred_fallthru
    _
  // Predicated region
  $region14: #{cls_decoder_forward.3} parent=0 // pred_check
    _
  $region15: #{cls_decoder_forward.3} parent=0 // pred_check_branch
    %22 = sbr.rel (0) target = $region17
  $region16: #{cls_decoder_forward.3} parent=0 // pred_region
    _
  $region17: #{cls_decoder_forward.3} parent=0 // pred_fallthru
    _
  // Predicated region
  $region18: #{cls_decoder_forward.3} parent=0 // pred_check
    _
  $region19: #{cls_decoder_forward.3} parent=0 // pred_check_branch
    %24 = sbr.rel (0) target = $region21
  $region20: #{cls_decoder_forward.3} parent=0 // pred_region
    _
  $region21: #{cls_decoder_forward.3} parent=0 // pred_fallthru
    _
  // Predicated region
  $region22: #{cls_decoder_forward.3} parent=0 // pred_check
    _
  $region23: #{cls_decoder_forward.3} parent=0 // pred_check_branch
    %26 = sbr.rel (0) target = $region25
  $region24: #{cls_decoder_forward.3} parent=0 // pred_region
    _
  $region25: #{cls_decoder_forward.3} parent=0 // pred_fallthru
    _
  // Predicated region
  $region26: #{cls_decoder_forward.3} parent=0 // pred_check
    _
  $region27: #{cls_decoder_forward.3} parent=0 // pred_check_branch
    %28 = sbr.rel (0) target = $region29
  $region28: #{cls_decoder_forward.3} parent=0 // pred_region
    _
  $region29: #{cls_decoder_forward.3} parent=0 // pred_fallthru
    _
  // Predicated region
  $region30: #{cls_decoder_forward.3} parent=0 // pred_check
    _
  $region31: #{cls_decoder_forward.3} parent=0 // pred_check_branch
    %30 = sbr.rel (0) target = $region33
  $region32: #{cls_decoder_forward.3} parent=0 // pred_region
    _
  $region33: #{cls_decoder_forward.3} parent=0 // pred_fallthru
    _
  // Predicated region
  $region34: #{cls_decoder_forward.3} parent=0 // pred_check
    _
  $region35: #{cls_decoder_forward.3} parent=0 // pred_check_branch
    %32 = sbr.rel (0) target = $region37
  $region36: #{cls_decoder_forward.3} parent=0 // pred_region
    _
  $region37: #{cls_decoder_forward.3} parent=0 // pred_fallthru
    _
  // Predicated region
  $region38: #{cls_decoder_forward.3} parent=0 // pred_check
    _
  $region39: #{cls_decoder_forward.3} parent=0 // pred_check_branch
    %34 = sbr.rel (0) target = $region41
  $region40: #{cls_decoder_forward.3} parent=0 // pred_region
    _
  $region41: #{cls_decoder_forward.3} parent=0 // pred_fallthru
    _
  %v35 = vld [vmem:[%s1] sm:$0x1]
  %36 = vxpose.xlu0.b32.start [1/16] %v35, 128
  %37 = vxpose.xlu0.b32.cont [2/16] 0.0, 128
  %38 = vxpose.xlu0.b32.cont [3/16] 0.0, 128
  %39 = vxpose.xlu0.b32.cont [4/16] 0.0, 128
  %40 = vxpose.xlu0.b32.cont [5/16] 0.0, 128
  %41 = vxpose.xlu0.b32.cont [6/16] 0.0, 128
  %42 = vxpose.xlu0.b32.cont [7/16] 0.0, 128
  %43 = vxpose.xlu0.b32.cont [8/16] 0.0, 128
  %44 = vxpose.xlu0.b32.cont [9/16] 0.0, 128
  %45 = vxpose.xlu0.b32.cont [10/16] 0.0, 128
  %46 = vxpose.xlu0.b32.cont [11/16] 0.0, 128
  %47 = vxpose.xlu0.b32.cont [12/16] 0.0, 128
  %48 = vxpose.xlu0.b32.cont [13/16] 0.0, 128
  %49 = vxpose.xlu0.b32.cont [14/16] 0.0, 128
  %50 = vxpose.xlu0.b32.cont [15/16] 0.0, 128
  %51 = vxpose.xlu0.b32.end [16/16] 0.0, 128
  %v52 = vpop.trf.xlu0
  %v53 = vpop.trf.xlu0
  %v54 = vpop.trf.xlu0
  %v55 = vpop.trf.xlu0
  %v56 = vpop.trf.xlu0
  %v57 = vpop.trf.xlu0
  %v58 = vpop.trf.xlu0
  %v59 = vpop.trf.xlu0
  %v60 = vpop.trf.xlu0
  %v61 = vpop.trf.xlu0
  %v62 = vpop.trf.xlu0
  %v63 = vpop.trf.xlu0
  %v64 = vpop.trf.xlu0
  %v65 = vpop.trf.xlu0
  %v66 = vpop.trf.xlu0
  %v67 = vpop.trf.xlu0
  %vm68 = vcmp.gt.f32.partialorder %v52, 0.0
  %vm69 = vcmp.gt.f32.partialorder %v53, 0.0
  %vm70 = vcmp.gt.f32.partialorder %v54, 0.0
  %vm71 = vcmp.gt.f32.partialorder %v55, 0.0
  %vm72 = vcmp.gt.f32.partialorder %v56, 0.0
  %vm73 = vcmp.gt.f32.partialorder %v57, 0.0
  %vm74 = vcmp.gt.f32.partialorder %v58, 0.0
  %vm75 = vcmp.gt.f32.partialorder %v59, 0.0
  %vm76 = vcmp.gt.f32.partialorder %v60, 0.0
  %vm77 = vcmp.gt.f32.partialorder %v61, 0.0
  %vm78 = vcmp.gt.f32.partialorder %v62, 0.0
  %vm79 = vcmp.gt.f32.partialorder %v63, 0.0
  %vm80 = vcmp.gt.f32.partialorder %v64, 0.0
  %vm81 = vcmp.gt.f32.partialorder %v65, 0.0
  %vm82 = vcmp.gt.f32.partialorder %v66, 0.0
  %vm83 = vcmp.gt.f32.partialorder %v67, 0.0
  %v84 = vsel %vm68, %v52, 1.0
  %v85 = vsel %vm69, %v53, 1.0
  %v86 = vsel %vm70, %v54, 1.0
  %v87 = vsel %vm71, %v55, 1.0
  %v88 = vsel %vm72, %v56, 1.0
  %v89 = vsel %vm73, %v57, 1.0
  %v90 = vsel %vm74, %v58, 1.0
  %v91 = vsel %vm75, %v59, 1.0
  %v92 = vsel %vm76, %v60, 1.0
  %v93 = vsel %vm77, %v61, 1.0
  %v94 = vsel %vm78, %v62, 1.0
  %v95 = vsel %vm79, %v63, 1.0
  %v96 = vsel %vm80, %v64, 1.0
  %v97 = vsel %vm81, %v65, 1.0
  %v98 = vsel %vm82, %v66, 1.0
  %v99 = vsel %vm83, %v67, 1.0
  %v100 = vld [vmem:[%s0] sm:$0xff]
  %v101 = vld [vmem:[%s0 + $0x8] sm:$0xff]
  %v102 = vld [vmem:[%s0 + $0x10] sm:$0xff]
  %v103 = vld [vmem:[%s0 + $0x18] sm:$0xff]
  %v104 = vld [vmem:[%s0 + $0x20] sm:$0xff]
  %v105 = vld [vmem:[%s0 + $0x28] sm:$0xff]
  %v106 = vld [vmem:[%s0 + $0x30] sm:$0xff]
  %v107 = vld [vmem:[%s0 + $0x38] sm:$0xff]
  %v108 = vld [vmem:[%s0 + $0x40] sm:$0xff]
  %v109 = vld [vmem:[%s0 + $0x48] sm:$0xff]
  %v110 = vld [vmem:[%s0 + $0x50] sm:$0xff]
  %v111 = vld [vmem:[%s0 + $0x58] sm:$0xff]
  %v112 = vld [vmem:[%s0 + $0x60] sm:$0xff]
  %v113 = vld [vmem:[%s0 + $0x68] sm:$0xff]
  %v114 = vld [vmem:[%s0 + $0x70] sm:$0xff]
  %v115 = vld [vmem:[%s0 + $0x78] sm:$0xff]
  %v116 = vrcp.pop %v84
  %v117 = vrcp.pop %v85
  %v118 = vrcp.pop %v86
  %v119 = vrcp.pop %v87
  %v120 = vrcp.pop %v88
  %v121 = vrcp.pop %v89
  %v122 = vrcp.pop %v90
  %v123 = vrcp.pop %v91
  %v124 = vrcp.pop %v92
  %v125 = vrcp.pop %v93
  %v126 = vrcp.pop %v94
  %v127 = vrcp.pop %v95
  %v128 = vrcp.pop %v96
  %v129 = vrcp.pop %v97
  %v130 = vrcp.pop %v98
  %v131 = vrcp.pop %v99
  %133 = vset.pattern.permute.xlu0 0
  %134 = vperm.xlu0 %133, %v116
  %v135 = vpop.permute.xlu0 %134
  %138 = vset.pattern.permute.xlu0 0
  %139 = vperm.xlu0 %138, %v117
  %v140 = vpop.permute.xlu0 %139
  %143 = vset.pattern.permute.xlu0 0
  %144 = vperm.xlu0 %143, %v118
  %v145 = vpop.permute.xlu0 %144
  %148 = vset.pattern.permute.xlu0 0
  %149 = vperm.xlu0 %148, %v119
  %v150 = vpop.permute.xlu0 %149
  %153 = vset.pattern.permute.xlu0 0
  %154 = vperm.xlu0 %153, %v120
  %v155 = vpop.permute.xlu0 %154
  %158 = vset.pattern.permute.xlu0 0
  %159 = vperm.xlu0 %158, %v121
  %v160 = vpop.permute.xlu0 %159
  %163 = vset.pattern.permute.xlu0 0
  %164 = vperm.xlu0 %163, %v122
  %v165 = vpop.permute.xlu0 %164
  %168 = vset.pattern.permute.xlu0 0
  %169 = vperm.xlu0 %168, %v123
  %v170 = vpop.permute.xlu0 %169
  %173 = vset.pattern.permute.xlu0 0
  %174 = vperm.xlu0 %173, %v124
  %v175 = vpop.permute.xlu0 %174
  %178 = vset.pattern.permute.xlu0 0
  %179 = vperm.xlu0 %178, %v125
  %v180 = vpop.permute.xlu0 %179
  %183 = vset.pattern.permute.xlu0 0
  %184 = vperm.xlu0 %183, %v126
  %v185 = vpop.permute.xlu0 %184
  %188 = vset.pattern.permute.xlu0 0
  %189 = vperm.xlu0 %188, %v127
  %v190 = vpop.permute.xlu0 %189
  %193 = vset.pattern.permute.xlu0 0
  %194 = vperm.xlu0 %193, %v128
  %v195 = vpop.permute.xlu0 %194
  %198 = vset.pattern.permute.xlu0 0
  %199 = vperm.xlu0 %198, %v129
  %v200 = vpop.permute.xlu0 %199
  %203 = vset.pattern.permute.xlu0 0
  %204 = vperm.xlu0 %203, %v130
  %v205 = vpop.permute.xlu0 %204
  %208 = vset.pattern.permute.xlu0 0
  %209 = vperm.xlu0 %208, %v131
  %v210 = vpop.permute.xlu0 %209
  %v212 = vmul.f32 %v100, %v135
  %v213 = vmul.f32 %v101, %v140
  %v214 = vmul.f32 %v102, %v145
  %v215 = vmul.f32 %v103, %v150
  %v216 = vmul.f32 %v104, %v155
  %v217 = vmul.f32 %v105, %v160
  %v218 = vmul.f32 %v106, %v165
  %v219 = vmul.f32 %v107, %v170
  %v220 = vmul.f32 %v108, %v175
  %v221 = vmul.f32 %v109, %v180
  %v222 = vmul.f32 %v110, %v185
  %v223 = vmul.f32 %v111, %v190
  %v224 = vmul.f32 %v112, %v195
  %v225 = vmul.f32 %v113, %v200
  %v226 = vmul.f32 %v114, %v205
  %v227 = vmul.f32 %v115, %v210
  %v228 = vld [vmem:[%s2] sm:$0x1]
  %v229 = vld [vmem:[%s3] sm:$0x1]
  %vm230 = vcmask 261120
  %v231 = vsel %vm230, %v212, 0.0
  %232 = vadd.xlane.f32.xlu0 %v231
  %v233 = vpop.xlane.xlu0 %232
  %v234 = vsel %vm230, %v213, 0.0
  %235 = vadd.xlane.f32.xlu0 %v234
  %v236 = vpop.xlane.xlu0 %235
  %v237 = vsel %vm230, %v214, 0.0
  %238 = vadd.xlane.f32.xlu0 %v237
  %v239 = vpop.xlane.xlu0 %238
  %v240 = vsel %vm230, %v215, 0.0
  %241 = vadd.xlane.f32.xlu0 %v240
  %v242 = vpop.xlane.xlu0 %241
  %v243 = vsel %vm230, %v216, 0.0
  %244 = vadd.xlane.f32.xlu0 %v243
  %v245 = vpop.xlane.xlu0 %244
  %v246 = vsel %vm230, %v217, 0.0
  %247 = vadd.xlane.f32.xlu0 %v246
  %v248 = vpop.xlane.xlu0 %247
  %v249 = vsel %vm230, %v218, 0.0
  %250 = vadd.xlane.f32.xlu0 %v249
  %v251 = vpop.xlane.xlu0 %250
  %v252 = vsel %vm230, %v219, 0.0
  %253 = vadd.xlane.f32.xlu0 %v252
  %v254 = vpop.xlane.xlu0 %253
  %v255 = vsel %vm230, %v220, 0.0
  %256 = vadd.xlane.f32.xlu0 %v255
  %v257 = vpop.xlane.xlu0 %256
  %v258 = vsel %vm230, %v221, 0.0
  %259 = vadd.xlane.f32.xlu0 %v258
  %v260 = vpop.xlane.xlu0 %259
  %v261 = vsel %vm230, %v222, 0.0
  %262 = vadd.xlane.f32.xlu0 %v261
  %v263 = vpop.xlane.xlu0 %262
  %v264 = vsel %vm230, %v223, 0.0
  %265 = vadd.xlane.f32.xlu0 %v264
  %v266 = vpop.xlane.xlu0 %265
  %v267 = vsel %vm230, %v224, 0.0
  %268 = vadd.xlane.f32.xlu0 %v267
  %v269 = vpop.xlane.xlu0 %268
  %v270 = vsel %vm230, %v225, 0.0
  %271 = vadd.xlane.f32.xlu0 %v270
  %v272 = vpop.xlane.xlu0 %271
  %v273 = vsel %vm230, %v226, 0.0
  %274 = vadd.xlane.f32.xlu0 %v273
  %v275 = vpop.xlane.xlu0 %274
  %v276 = vsel %vm230, %v227, 0.0
  %277 = vadd.xlane.f32.xlu0 %v276
  %v278 = vpop.xlane.xlu0 %277
  %v279 = vrcp.pop 32.0
  %v280 = vmul.f32 %v233, %v279
  %v281 = vmul.f32 %v236, %v279
  %v282 = vmul.f32 %v239, %v279
  %v283 = vmul.f32 %v242, %v279
  %v284 = vmul.f32 %v245, %v279
  %v285 = vmul.f32 %v248, %v279
  %v286 = vmul.f32 %v251, %v279
  %v287 = vmul.f32 %v254, %v279
  %v288 = vmul.f32 %v257, %v279
  %v289 = vmul.f32 %v260, %v279
  %v290 = vmul.f32 %v263, %v279
  %v291 = vmul.f32 %v266, %v279
  %v292 = vmul.f32 %v269, %v279
  %v293 = vmul.f32 %v272, %v279
  %v294 = vmul.f32 %v275, %v279
  %v295 = vmul.f32 %v278, %v279
  %v296 = vsub.f32 %v212, %v280
  %v297 = vsub.f32 %v213, %v281
  %v298 = vsub.f32 %v214, %v282
  %v299 = vsub.f32 %v215, %v283
  %v300 = vsub.f32 %v216, %v284
  %v301 = vsub.f32 %v217, %v285
  %v302 = vsub.f32 %v218, %v286
  %v303 = vsub.f32 %v219, %v287
  %v304 = vsub.f32 %v220, %v288
  %v305 = vsub.f32 %v221, %v289
  %v306 = vsub.f32 %v222, %v290
  %v307 = vsub.f32 %v223, %v291
  %v308 = vsub.f32 %v224, %v292
  %v309 = vsub.f32 %v225, %v293
  %v310 = vsub.f32 %v226, %v294
  %v311 = vsub.f32 %v227, %v295
  %v312 = vmul.f32 %v296, %v296
  %v313 = vmul.f32 %v297, %v297
  %v314 = vmul.f32 %v298, %v298
  %v315 = vmul.f32 %v299, %v299
  %v316 = vmul.f32 %v300, %v300
  %v317 = vmul.f32 %v301, %v301
  %v318 = vmul.f32 %v302, %v302
  %v319 = vmul.f32 %v303, %v303
  %v320 = vmul.f32 %v304, %v304
  %v321 = vmul.f32 %v305, %v305
  %v322 = vmul.f32 %v306, %v306
  %v323 = vmul.f32 %v307, %v307
  %v324 = vmul.f32 %v308, %v308
  %v325 = vmul.f32 %v309, %v309
  %v326 = vmul.f32 %v310, %v310
  %v327 = vmul.f32 %v311, %v311
  %v328 = vsel %vm230, %v312, 0.0
  %329 = vadd.xlane.f32.xlu0 %v328
  %v330 = vpop.xlane.xlu0 %329
  %v331 = vsel %vm230, %v313, 0.0
  %332 = vadd.xlane.f32.xlu0 %v331
  %v333 = vpop.xlane.xlu0 %332
  %v334 = vsel %vm230, %v314, 0.0
  %335 = vadd.xlane.f32.xlu0 %v334
  %v336 = vpop.xlane.xlu0 %335
  %v337 = vsel %vm230, %v315, 0.0
  %338 = vadd.xlane.f32.xlu0 %v337
  %v339 = vpop.xlane.xlu0 %338
  %v340 = vsel %vm230, %v316, 0.0
  %341 = vadd.xlane.f32.xlu0 %v340
  %v342 = vpop.xlane.xlu0 %341
  %v343 = vsel %vm230, %v317, 0.0
  %344 = vadd.xlane.f32.xlu0 %v343
  %v345 = vpop.xlane.xlu0 %344
  %v346 = vsel %vm230, %v318, 0.0
  %347 = vadd.xlane.f32.xlu0 %v346
  %v348 = vpop.xlane.xlu0 %347
  %v349 = vsel %vm230, %v319, 0.0
  %350 = vadd.xlane.f32.xlu0 %v349
  %v351 = vpop.xlane.xlu0 %350
  %v352 = vsel %vm230, %v320, 0.0
  %353 = vadd.xlane.f32.xlu0 %v352
  %v354 = vpop.xlane.xlu0 %353
  %v355 = vsel %vm230, %v321, 0.0
  %356 = vadd.xlane.f32.xlu0 %v355
  %v357 = vpop.xlane.xlu0 %356
  %v358 = vsel %vm230, %v322, 0.0
  %359 = vadd.xlane.f32.xlu0 %v358
  %v360 = vpop.xlane.xlu0 %359
  %v361 = vsel %vm230, %v323, 0.0
  %362 = vadd.xlane.f32.xlu0 %v361
  %v363 = vpop.xlane.xlu0 %362
  %v364 = vsel %vm230, %v324, 0.0
  %365 = vadd.xlane.f32.xlu0 %v364
  %v366 = vpop.xlane.xlu0 %365
  %v367 = vsel %vm230, %v325, 0.0
  %368 = vadd.xlane.f32.xlu0 %v367
  %v369 = vpop.xlane.xlu0 %368
  %v370 = vsel %vm230, %v326, 0.0
  %371 = vadd.xlane.f32.xlu0 %v370
  %v372 = vpop.xlane.xlu0 %371
  %v373 = vsel %vm230, %v327, 0.0
  %374 = vadd.xlane.f32.xlu0 %v373
  %v375 = vpop.xlane.xlu0 %374
  %v376 = vmul.f32 %v330, %v279
  %v377 = vmul.f32 %v333, %v279
  %v378 = vmul.f32 %v336, %v279
  %v379 = vmul.f32 %v339, %v279
  %v380 = vmul.f32 %v342, %v279
  %v381 = vmul.f32 %v345, %v279
  %v382 = vmul.f32 %v348, %v279
  %v383 = vmul.f32 %v351, %v279
  %v384 = vmul.f32 %v354, %v279
  %v385 = vmul.f32 %v357, %v279
  %v386 = vmul.f32 %v360, %v279
  %v387 = vmul.f32 %v363, %v279
  %v388 = vmul.f32 %v366, %v279
  %v389 = vmul.f32 %v369, %v279
  %v390 = vmul.f32 %v372, %v279
  %v391 = vmul.f32 %v375, %v279
  %v392 = vadd.f32 %v376, 1e-05
  %v393 = vadd.f32 %v377, 1e-05
  %v394 = vadd.f32 %v378, 1e-05
  %v395 = vadd.f32 %v379, 1e-05
  %v396 = vadd.f32 %v380, 1e-05
  %v397 = vadd.f32 %v381, 1e-05
  %v398 = vadd.f32 %v382, 1e-05
  %v399 = vadd.f32 %v383, 1e-05
  %v400 = vadd.f32 %v384, 1e-05
  %v401 = vadd.f32 %v385, 1e-05
  %v402 = vadd.f32 %v386, 1e-05
  %v403 = vadd.f32 %v387, 1e-05
  %v404 = vadd.f32 %v388, 1e-05
  %v405 = vadd.f32 %v389, 1e-05
  %v406 = vadd.f32 %v390, 1e-05
  %v407 = vadd.f32 %v391, 1e-05
  %v408 = vrsqrt.pop %v392
  %v409 = vrsqrt.pop %v393
  %v410 = vrsqrt.pop %v394
  %v411 = vrsqrt.pop %v395
  %v412 = vrsqrt.pop %v396
  %v413 = vrsqrt.pop %v397
  %v414 = vrsqrt.pop %v398
  %v415 = vrsqrt.pop %v399
  %v416 = vrsqrt.pop %v400
  %v417 = vrsqrt.pop %v401
  %v418 = vrsqrt.pop %v402
  %v419 = vrsqrt.pop %v403
  %v420 = vrsqrt.pop %v404
  %v421 = vrsqrt.pop %v405
  %v422 = vrsqrt.pop %v406
  %v423 = vrsqrt.pop %v407
  %v424 = vmul.f32 %v296, %v408
  %v425 = vmul.f32 %v297, %v409
  %v426 = vmul.f32 %v298, %v410
  %v427 = vmul.f32 %v299, %v411
  %v428 = vmul.f32 %v300, %v412
  %v429 = vmul.f32 %v301, %v413
  %v430 = vmul.f32 %v302, %v414
  %v431 = vmul.f32 %v303, %v415
  %v432 = vmul.f32 %v304, %v416
  %v433 = vmul.f32 %v305, %v417
  %v434 = vmul.f32 %v306, %v418
  %v435 = vmul.f32 %v307, %v419
  %v436 = vmul.f32 %v308, %v420
  %v437 = vmul.f32 %v309, %v421
  %v438 = vmul.f32 %v310, %v422
  %v439 = vmul.f32 %v311, %v423
  %v441 = vlaneseq
  %v442 = vshrl.u32 %v441, 7
  %v443 = vsub.s32 0, %v442
  %v444 = vrot.slane %v228, %v443
  %v446 = vmul.f32 %v424, %v444
  %v447 = vmul.f32 %v425, %v444
  %v448 = vmul.f32 %v426, %v444
  %v449 = vmul.f32 %v427, %v444
  %v450 = vmul.f32 %v428, %v444
  %v451 = vmul.f32 %v429, %v444
  %v452 = vmul.f32 %v430, %v444
  %v453 = vmul.f32 %v431, %v444
  %v454 = vmul.f32 %v432, %v444
  %v455 = vmul.f32 %v433, %v444
  %v456 = vmul.f32 %v434, %v444
  %v457 = vmul.f32 %v435, %v444
  %v458 = vmul.f32 %v436, %v444
  %v459 = vmul.f32 %v437, %v444
  %v460 = vmul.f32 %v438, %v444
  %v461 = vmul.f32 %v439, %v444
  %v463 = vlaneseq
  %v464 = vshrl.u32 %v463, 7
  %v465 = vsub.s32 0, %v464
  %v466 = vrot.slane %v229, %v465
  %v468 = vadd.f32 %v446, %v466
  %v469 = vadd.f32 %v447, %v466
  %v470 = vadd.f32 %v448, %v466
  %v471 = vadd.f32 %v449, %v466
  %v472 = vadd.f32 %v450, %v466
  %v473 = vadd.f32 %v451, %v466
  %v474 = vadd.f32 %v452, %v466
  %v475 = vadd.f32 %v453, %v466
  %v476 = vadd.f32 %v454, %v466
  %v477 = vadd.f32 %v455, %v466
  %v478 = vadd.f32 %v456, %v466
  %v479 = vadd.f32 %v457, %v466
  %v480 = vadd.f32 %v458, %v466
  %v481 = vadd.f32 %v459, %v466
  %v482 = vadd.f32 %v460, %v466
  %v483 = vadd.f32 %v461, %v466
  %v484 = vld [vmem:[%s4] sm:$0xff]
  %v485 = vld [vmem:[%s4 + $0x8] sm:$0xff]
  %v486 = vld [vmem:[%s4 + $0x10] sm:$0xff]
  %v487 = vld [vmem:[%s4 + $0x18] sm:$0xff]
  %v488 = vld [vmem:[%s5] sm:$0x1]
  %v490 = vlaneseq
  %v491 = vshrl.u32 %v490, 7
  %v492 = vsub.s32 0, %v491
  %v493 = vrot.slane %v488, %v492
  %v496 = vsel %vm230, %v468, 0
  %v499 = vsel %vm230, %v469, 0
  %v502 = vsel %vm230, %v470, 0
  %v505 = vsel %vm230, %v471, 0
  %v508 = vsel %vm230, %v472, 0
  %v511 = vsel %vm230, %v473, 0
  %v514 = vsel %vm230, %v474, 0
  %v517 = vsel %vm230, %v475, 0
  %v520 = vsel %vm230, %v476, 0
  %v523 = vsel %vm230, %v477, 0
  %v526 = vsel %vm230, %v478, 0
  %v529 = vsel %vm230, %v479, 0
  %v532 = vsel %vm230, %v480, 0
  %v535 = vsel %vm230, %v481, 0
  %v538 = vsel %vm230, %v482, 0
  %v541 = vsel %vm230, %v483, 0
  %543 = vmatprep.subr.mxu0 0.0
  %544 = vmatpush1.msra.mxu0 %v484
  %545 = vmatprep.subr.mxu0 0.0
  %546 = vmatpush1.msra.mxu0 %v485
  %547 = vmatprep.subr.mxu0 0.0
  %548 = vmatpush1.msra.mxu0 %v486
  %549 = vmatprep.subr.mxu0 0.0
  %550 = vmatpush1.msra.mxu0 %v487
  %551 = vmatprep.subr.mxu0 0.0
  %552 = vmatpush1.msra.mxu0 0.0
  %553 = vmatprep.subr.mxu0 0.0
  %554 = vmatpush1.msra.mxu0 0.0
  %555 = vmatprep.subr.mxu0 0.0
  %556 = vmatpush1.msra.mxu0 0.0
  %557 = vmatprep.subr.mxu0 0.0
  %558 = vmatpush1.msra.mxu0 0.0
  %559 = vmatprep.subr.mxu0 0.0
  %560 = vmatpush1.msra.mxu0 0.0
  %561 = vmatprep.subr.mxu0 0.0
  %562 = vmatpush1.msra.mxu0 0.0
  %563 = vmatprep.subr.mxu0 0.0
  %564 = vmatpush1.msra.mxu0 0.0
  %565 = vmatprep.subr.mxu0 0.0
  %566 = vmatpush1.msra.mxu0 0.0
  %567 = vmatprep.subr.mxu0 0.0
  %568 = vmatpush1.msra.mxu0 0.0
  %569 = vmatprep.subr.mxu0 0.0
  %570 = vmatpush1.msra.mxu0 0.0
  %571 = vmatprep.subr.mxu0 0.0
  %572 = vmatpush1.msra.mxu0 0.0
  %573 = vmatprep.subr.mxu0 0.0
  %574 = vmatpush1.msra.mxu0 0.0
  %575 = vmatprep.subr.mxu0 0.0
  %576 = vmatpush1.msra.mxu0 0.0
  %577 = vmatprep.subr.mxu0 0.0
  %578 = vmatpush1.msra.mxu0 0.0
  %579 = vmatprep.subr.mxu0 0.0
  %580 = vmatpush1.msra.mxu0 0.0
  %581 = vmatprep.subr.mxu0 0.0
  %582 = vmatpush1.msra.mxu0 0.0
  %583 = vmatprep.subr.mxu0 0.0
  %584 = vmatpush1.msra.mxu0 0.0
  %585 = vmatprep.subr.mxu0 0.0
  %586 = vmatpush1.msra.mxu0 0.0
  %587 = vmatprep.subr.mxu0 0.0
  %588 = vmatpush1.msra.mxu0 0.0
  %589 = vmatprep.subr.mxu0 0.0
  %590 = vmatpush1.msra.mxu0 0.0
  %591 = vmatprep.subr.mxu0 0.0
  %592 = vmatpush1.msra.mxu0 0.0
  %593 = vmatprep.subr.mxu0 0.0
  %594 = vmatpush1.msra.mxu0 0.0
  %595 = vmatprep.subr.mxu0 0.0
  %596 = vmatpush1.msra.mxu0 0.0
  %597 = vmatprep.subr.mxu0 0.0
  %598 = vmatpush1.msra.mxu0 0.0
  %599 = vmatprep.subr.mxu0 0.0
  %600 = vmatpush1.msra.mxu0 0.0
  %601 = vmatprep.subr.mxu0 0.0
  %602 = vmatpush1.msra.mxu0 0.0
  %603 = vmatprep.subr.mxu0 0.0
  %604 = vmatpush1.msra.mxu0 0.0
  %605 = vmatprep.subr.mxu0 0.0
  %606 = vmatpush1.msra.mxu0 0.0
  %607 = vmatprep.mubr.f32.mxu0 0.0
  %608 = vmatmul.mubr.f32.gmra.mrb[0].mxu0 %v496
  %v609 = vpop.f32.mrb[0].mxu0
  %v610 = vadd.f32 %v493, %v609
  %v611 = vpop.f32.mrb[0].mxu0
  %612 = vmatprep.mubr.f32.mxu0 0.0
  %613 = vmatmul.mubr.f32.gmra.mrb[0].mxu0 %v499
  %v614 = vpop.f32.mrb[0].mxu0
  %v615 = vadd.f32 %v493, %v614
  %v616 = vpop.f32.mrb[0].mxu0
  %617 = vmatprep.mubr.f32.mxu0 0.0
  %618 = vmatmul.mubr.f32.gmra.mrb[0].mxu0 %v502
  %v619 = vpop.f32.mrb[0].mxu0
  %v620 = vadd.f32 %v493, %v619
  %v621 = vpop.f32.mrb[0].mxu0
  %622 = vmatprep.mubr.f32.mxu0 0.0
  %623 = vmatmul.mubr.f32.gmra.mrb[0].mxu0 %v505
  %v624 = vpop.f32.mrb[0].mxu0
  %v625 = vadd.f32 %v493, %v624
  %v626 = vpop.f32.mrb[0].mxu0
  %627 = vmatprep.mubr.f32.mxu0 0.0
  %628 = vmatmul.mubr.f32.gmra.mrb[0].mxu0 %v508
  %v629 = vpop.f32.mrb[0].mxu0
  %v630 = vadd.f32 %v493, %v629
  %v631 = vpop.f32.mrb[0].mxu0
  %632 = vmatprep.mubr.f32.mxu0 0.0
  %633 = vmatmul.mubr.f32.gmra.mrb[0].mxu0 %v511
  %v634 = vpop.f32.mrb[0].mxu0
  %v635 = vadd.f32 %v493, %v634
  %v636 = vpop.f32.mrb[0].mxu0
  %637 = vmatprep.mubr.f32.mxu0 0.0
  %638 = vmatmul.mubr.f32.gmra.mrb[0].mxu0 %v514
  %v639 = vpop.f32.mrb[0].mxu0
  %v640 = vadd.f32 %v493, %v639
  %v641 = vpop.f32.mrb[0].mxu0
  %642 = vmatprep.mubr.f32.mxu0 0.0
  %643 = vmatmul.mubr.f32.gmra.mrb[0].mxu0 %v517
  %v644 = vpop.f32.mrb[0].mxu0
  %v645 = vadd.f32 %v493, %v644
  %v646 = vpop.f32.mrb[0].mxu0
  %647 = vmatprep.mubr.f32.mxu0 0.0
  %648 = vmatmul.mubr.f32.gmra.mrb[0].mxu0 %v520
  %v649 = vpop.f32.mrb[0].mxu0
  %v650 = vadd.f32 %v493, %v649
  %v651 = vpop.f32.mrb[0].mxu0
  %652 = vmatprep.mubr.f32.mxu0 0.0
  %653 = vmatmul.mubr.f32.gmra.mrb[0].mxu0 %v523
  %v654 = vpop.f32.mrb[0].mxu0
  %v655 = vadd.f32 %v493, %v654
  %v656 = vpop.f32.mrb[0].mxu0
  %657 = vmatprep.mubr.f32.mxu0 0.0
  %658 = vmatmul.mubr.f32.gmra.mrb[0].mxu0 %v526
  %v659 = vpop.f32.mrb[0].mxu0
  %v660 = vadd.f32 %v493, %v659
  %v661 = vpop.f32.mrb[0].mxu0
  %662 = vmatprep.mubr.f32.mxu0 0.0
  %663 = vmatmul.mubr.f32.gmra.mrb[0].mxu0 %v529
  %v664 = vpop.f32.mrb[0].mxu0
  %v665 = vadd.f32 %v493, %v664
  %v666 = vpop.f32.mrb[0].mxu0
  %667 = vmatprep.mubr.f32.mxu0 0.0
  %668 = vmatmul.mubr.f32.gmra.mrb[0].mxu0 %v532
  %v669 = vpop.f32.mrb[0].mxu0
  %v670 = vadd.f32 %v493, %v669
  %v671 = vpop.f32.mrb[0].mxu0
  %672 = vmatprep.mubr.f32.mxu0 0.0
  %673 = vmatmul.mubr.f32.gmra.mrb[0].mxu0 %v535
  %v674 = vpop.f32.mrb[0].mxu0
  %v675 = vadd.f32 %v493, %v674
  %v676 = vpop.f32.mrb[0].mxu0
  %677 = vmatprep.mubr.f32.mxu0 0.0
  %678 = vmatmul.mubr.f32.gmra.mrb[0].mxu0 %v538
  %v679 = vpop.f32.mrb[0].mxu0
  %v680 = vadd.f32 %v493, %v679
  %v681 = vpop.f32.mrb[0].mxu0
  %682 = vmatprep.mubr.f32.mxu0 0.0
  %683 = vmatmul.mubr.f32.gmra.mrb[0].mxu0 %v541
  %v684 = vpop.f32.mrb[0].mxu0
  %v685 = vadd.f32 %v493, %v684
  %v686 = vpop.f32.mrb[0].mxu0
  %687 = vdwg.mxu0
  %v688 = vld [vmem:[%s6] sm:$0x1]
  %v689 = vld [vmem:[%s7] sm:$0x1]
  %v690 = vsel %vm230, %v610, 0.0
  %691 = vadd.xlane.f32.xlu0 %v690
  %v692 = vpop.xlane.xlu0 %691
  %v693 = vsel %vm230, %v615, 0.0
  %694 = vadd.xlane.f32.xlu0 %v693
  %v695 = vpop.xlane.xlu0 %694
  %v696 = vsel %vm230, %v620, 0.0
  %697 = vadd.xlane.f32.xlu0 %v696
  %v698 = vpop.xlane.xlu0 %697
  %v699 = vsel %vm230, %v625, 0.0
  %700 = vadd.xlane.f32.xlu0 %v699
  %v701 = vpop.xlane.xlu0 %700
  %v702 = vsel %vm230, %v630, 0.0
  %703 = vadd.xlane.f32.xlu0 %v702
  %v704 = vpop.xlane.xlu0 %703
  %v705 = vsel %vm230, %v635, 0.0
  %706 = vadd.xlane.f32.xlu0 %v705
  %v707 = vpop.xlane.xlu0 %706
  %v708 = vsel %vm230, %v640, 0.0
  %709 = vadd.xlane.f32.xlu0 %v708
  %v710 = vpop.xlane.xlu0 %709
  %v711 = vsel %vm230, %v645, 0.0
  %712 = vadd.xlane.f32.xlu0 %v711
  %v713 = vpop.xlane.xlu0 %712
  %v714 = vsel %vm230, %v650, 0.0
  %715 = vadd.xlane.f32.xlu0 %v714
  %v716 = vpop.xlane.xlu0 %715
  %v717 = vsel %vm230, %v655, 0.0
  %718 = vadd.xlane.f32.xlu0 %v717
  %v719 = vpop.xlane.xlu0 %718
  %v720 = vsel %vm230, %v660, 0.0
  %721 = vadd.xlane.f32.xlu0 %v720
  %v722 = vpop.xlane.xlu0 %721
  %v723 = vsel %vm230, %v665, 0.0
  %724 = vadd.xlane.f32.xlu0 %v723
  %v725 = vpop.xlane.xlu0 %724
  %v726 = vsel %vm230, %v670, 0.0
  %727 = vadd.xlane.f32.xlu0 %v726
  %v728 = vpop.xlane.xlu0 %727
  %v729 = vsel %vm230, %v675, 0.0
  %730 = vadd.xlane.f32.xlu0 %v729
  %v731 = vpop.xlane.xlu0 %730
  %v732 = vsel %vm230, %v680, 0.0
  %733 = vadd.xlane.f32.xlu0 %v732
  %v734 = vpop.xlane.xlu0 %733
  %v735 = vsel %vm230, %v685, 0.0
  %736 = vadd.xlane.f32.xlu0 %v735
  %v737 = vpop.xlane.xlu0 %736
  %v738 = vmul.f32 %v692, %v279
  %v739 = vmul.f32 %v695, %v279
  %v740 = vmul.f32 %v698, %v279
  %v741 = vmul.f32 %v701, %v279
  %v742 = vmul.f32 %v704, %v279
  %v743 = vmul.f32 %v707, %v279
  %v744 = vmul.f32 %v710, %v279
  %v745 = vmul.f32 %v713, %v279
  %v746 = vmul.f32 %v716, %v279
  %v747 = vmul.f32 %v719, %v279
  %v748 = vmul.f32 %v722, %v279
  %v749 = vmul.f32 %v725, %v279
  %v750 = vmul.f32 %v728, %v279
  %v751 = vmul.f32 %v731, %v279
  %v752 = vmul.f32 %v734, %v279
  %v753 = vmul.f32 %v737, %v279
  %v754 = vsub.f32 %v610, %v738
  %v755 = vsub.f32 %v615, %v739
  %v756 = vsub.f32 %v620, %v740
  %v757 = vsub.f32 %v625, %v741
  %v758 = vsub.f32 %v630, %v742
  %v759 = vsub.f32 %v635, %v743
  %v760 = vsub.f32 %v640, %v744
  %v761 = vsub.f32 %v645, %v745
  %v762 = vsub.f32 %v650, %v746
  %v763 = vsub.f32 %v655, %v747
  %v764 = vsub.f32 %v660, %v748
  %v765 = vsub.f32 %v665, %v749
  %v766 = vsub.f32 %v670, %v750
  %v767 = vsub.f32 %v675, %v751
  %v768 = vsub.f32 %v680, %v752
  %v769 = vsub.f32 %v685, %v753
  %v770 = vmul.f32 %v754, %v754
  %v771 = vmul.f32 %v755, %v755
  %v772 = vmul.f32 %v756, %v756
  %v773 = vmul.f32 %v757, %v757
  %v774 = vmul.f32 %v758, %v758
  %v775 = vmul.f32 %v759, %v759
  %v776 = vmul.f32 %v760, %v760
  %v777 = vmul.f32 %v761, %v761
  %v778 = vmul.f32 %v762, %v762
  %v779 = vmul.f32 %v763, %v763
  %v780 = vmul.f32 %v764, %v764
  %v781 = vmul.f32 %v765, %v765
  %v782 = vmul.f32 %v766, %v766
  %v783 = vmul.f32 %v767, %v767
  %v784 = vmul.f32 %v768, %v768
  %v785 = vmul.f32 %v769, %v769
  %v786 = vsel %vm230, %v770, 0.0
  %787 = vadd.xlane.f32.xlu0 %v786
  %v788 = vpop.xlane.xlu0 %787
  %v789 = vsel %vm230, %v771, 0.0
  %790 = vadd.xlane.f32.xlu0 %v789
  %v791 = vpop.xlane.xlu0 %790
  %v792 = vsel %vm230, %v772, 0.0
  %793 = vadd.xlane.f32.xlu0 %v792
  %v794 = vpop.xlane.xlu0 %793
  %v795 = vsel %vm230, %v773, 0.0
  %796 = vadd.xlane.f32.xlu0 %v795
  %v797 = vpop.xlane.xlu0 %796
  %v798 = vsel %vm230, %v774, 0.0
  %799 = vadd.xlane.f32.xlu0 %v798
  %v800 = vpop.xlane.xlu0 %799
  %v801 = vsel %vm230, %v775, 0.0
  %802 = vadd.xlane.f32.xlu0 %v801
  %v803 = vpop.xlane.xlu0 %802
  %v804 = vsel %vm230, %v776, 0.0
  %805 = vadd.xlane.f32.xlu0 %v804
  %v806 = vpop.xlane.xlu0 %805
  %v807 = vsel %vm230, %v777, 0.0
  %808 = vadd.xlane.f32.xlu0 %v807
  %v809 = vpop.xlane.xlu0 %808
  %v810 = vsel %vm230, %v778, 0.0
  %811 = vadd.xlane.f32.xlu0 %v810
  %v812 = vpop.xlane.xlu0 %811
  %v813 = vsel %vm230, %v779, 0.0
  %814 = vadd.xlane.f32.xlu0 %v813
  %v815 = vpop.xlane.xlu0 %814
  %v816 = vsel %vm230, %v780, 0.0
  %817 = vadd.xlane.f32.xlu0 %v816
  %v818 = vpop.xlane.xlu0 %817
  %v819 = vsel %vm230, %v781, 0.0
  %820 = vadd.xlane.f32.xlu0 %v819
  %v821 = vpop.xlane.xlu0 %820
  %v822 = vsel %vm230, %v782, 0.0
  %823 = vadd.xlane.f32.xlu0 %v822
  %v824 = vpop.xlane.xlu0 %823
  %v825 = vsel %vm230, %v783, 0.0
  %826 = vadd.xlane.f32.xlu0 %v825
  %v827 = vpop.xlane.xlu0 %826
  %v828 = vsel %vm230, %v784, 0.0
  %829 = vadd.xlane.f32.xlu0 %v828
  %v830 = vpop.xlane.xlu0 %829
  %v831 = vsel %vm230, %v785, 0.0
  %832 = vadd.xlane.f32.xlu0 %v831
  %v833 = vpop.xlane.xlu0 %832
  %v834 = vmul.f32 %v788, %v279
  %v835 = vmul.f32 %v791, %v279
  %v836 = vmul.f32 %v794, %v279
  %v837 = vmul.f32 %v797, %v279
  %v838 = vmul.f32 %v800, %v279
  %v839 = vmul.f32 %v803, %v279
  %v840 = vmul.f32 %v806, %v279
  %v841 = vmul.f32 %v809, %v279
  %v842 = vmul.f32 %v812, %v279
  %v843 = vmul.f32 %v815, %v279
  %v844 = vmul.f32 %v818, %v279
  %v845 = vmul.f32 %v821, %v279
  %v846 = vmul.f32 %v824, %v279
  %v847 = vmul.f32 %v827, %v279
  %v848 = vmul.f32 %v830, %v279
  %v849 = vmul.f32 %v833, %v279
  %v850 = vadd.f32 %v834, 1e-05
  %v851 = vadd.f32 %v835, 1e-05
  %v852 = vadd.f32 %v836, 1e-05
  %v853 = vadd.f32 %v837, 1e-05
  %v854 = vadd.f32 %v838, 1e-05
  %v855 = vadd.f32 %v839, 1e-05
  %v856 = vadd.f32 %v840, 1e-05
  %v857 = vadd.f32 %v841, 1e-05
  %v858 = vadd.f32 %v842, 1e-05
  %v859 = vadd.f32 %v843, 1e-05
  %v860 = vadd.f32 %v844, 1e-05
  %v861 = vadd.f32 %v845, 1e-05
  %v862 = vadd.f32 %v846, 1e-05
  %v863 = vadd.f32 %v847, 1e-05
  %v864 = vadd.f32 %v848, 1e-05
  %v865 = vadd.f32 %v849, 1e-05
  %v866 = vrsqrt.pop %v850
  %v867 = vrsqrt.pop %v851
  %v868 = vrsqrt.pop %v852
  %v869 = vrsqrt.pop %v853
  %v870 = vrsqrt.pop %v854
  %v871 = vrsqrt.pop %v855
  %v872 = vrsqrt.pop %v856
  %v873 = vrsqrt.pop %v857
  %v874 = vrsqrt.pop %v858
  %v875 = vrsqrt.pop %v859
  %v876 = vrsqrt.pop %v860
  %v877 = vrsqrt.pop %v861
  %v878 = vrsqrt.pop %v862
  %v879 = vrsqrt.pop %v863
  %v880 = vrsqrt.pop %v864
  %v881 = vrsqrt.pop %v865
  %v882 = vmul.f32 %v754, %v866
  %v883 = vmul.f32 %v755, %v867
  %v884 = vmul.f32 %v756, %v868
  %v885 = vmul.f32 %v757, %v869
  %v886 = vmul.f32 %v758, %v870
  %v887 = vmul.f32 %v759, %v871
  %v888 = vmul.f32 %v760, %v872
  %v889 = vmul.f32 %v761, %v873
  %v890 = vmul.f32 %v762, %v874
  %v891 = vmul.f32 %v763, %v875
  %v892 = vmul.f32 %v764, %v876
  %v893 = vmul.f32 %v765, %v877
  %v894 = vmul.f32 %v766, %v878
  %v895 = vmul.f32 %v767, %v879
  %v896 = vmul.f32 %v768, %v880
  %v897 = vmul.f32 %v769, %v881
  %v899 = vlaneseq
  %v900 = vshrl.u32 %v899, 7
  %v901 = vsub.s32 0, %v900
  %v902 = vrot.slane %v688, %v901
  %v904 = vmul.f32 %v882, %v902
  %v905 = vmul.f32 %v883, %v902
  %v906 = vmul.f32 %v884, %v902
  %v907 = vmul.f32 %v885, %v902
  %v908 = vmul.f32 %v886, %v902
  %v909 = vmul.f32 %v887, %v902
  %v910 = vmul.f32 %v888, %v902
  %v911 = vmul.f32 %v889, %v902
  %v912 = vmul.f32 %v890, %v902
  %v913 = vmul.f32 %v891, %v902
  %v914 = vmul.f32 %v892, %v902
  %v915 = vmul.f32 %v893, %v902
  %v916 = vmul.f32 %v894, %v902
  %v917 = vmul.f32 %v895, %v902
  %v918 = vmul.f32 %v896, %v902
  %v919 = vmul.f32 %v897, %v902
  %v921 = vlaneseq
  %v922 = vshrl.u32 %v921, 7
  %v923 = vsub.s32 0, %v922
  %v924 = vrot.slane %v689, %v923
  %v926 = vadd.f32 %v904, %v924
  %v927 = vadd.f32 %v905, %v924
  %v928 = vadd.f32 %v906, %v924
  %v929 = vadd.f32 %v907, %v924
  %v930 = vadd.f32 %v908, %v924
  %v931 = vadd.f32 %v909, %v924
  %v932 = vadd.f32 %v910, %v924
  %v933 = vadd.f32 %v911, %v924
  %v934 = vadd.f32 %v912, %v924
  %v935 = vadd.f32 %v913, %v924
  %v936 = vadd.f32 %v914, %v924
  %v937 = vadd.f32 %v915, %v924
  %v938 = vadd.f32 %v916, %v924
  %v939 = vadd.f32 %v917, %v924
  %v940 = vadd.f32 %v918, %v924
  %v941 = vadd.f32 %v919, %v924
  %v942 = vmax.f32 %v926, 0.0
  %v943 = vmax.f32 %v927, 0.0
  %v944 = vmax.f32 %v928, 0.0
  %v945 = vmax.f32 %v929, 0.0
  %v946 = vmax.f32 %v930, 0.0
  %v947 = vmax.f32 %v931, 0.0
  %v948 = vmax.f32 %v932, 0.0
  %v949 = vmax.f32 %v933, 0.0
  %v950 = vmax.f32 %v934, 0.0
  %v951 = vmax.f32 %v935, 0.0
  %v952 = vmax.f32 %v936, 0.0
  %v953 = vmax.f32 %v937, 0.0
  %v954 = vmax.f32 %v938, 0.0
  %v955 = vmax.f32 %v939, 0.0
  %v956 = vmax.f32 %v940, 0.0
  %v957 = vmax.f32 %v941, 0.0
  %v958 = vld [vmem:[%s8] sm:$0xff]
  %v959 = vld [vmem:[%s8 + $0x8] sm:$0xff]
  %v960 = vld [vmem:[%s8 + $0x10] sm:$0xff]
  %v961 = vld [vmem:[%s8 + $0x18] sm:$0xff]
  %v962 = vld [vmem:[%s9] sm:$0x1]
  %v964 = vlaneseq
  %v965 = vshrl.u32 %v964, 7
  %v966 = vsub.s32 0, %v965
  %v967 = vrot.slane %v962, %v966
  %v970 = vsel %vm230, %v942, 0
  %v973 = vsel %vm230, %v943, 0
  %v976 = vsel %vm230, %v944, 0
  %v979 = vsel %vm230, %v945, 0
  %v982 = vsel %vm230, %v946, 0
  %v985 = vsel %vm230, %v947, 0
  %v988 = vsel %vm230, %v948, 0
  %v991 = vsel %vm230, %v949, 0
  %v994 = vsel %vm230, %v950, 0
  %v997 = vsel %vm230, %v951, 0
  %v1000 = vsel %vm230, %v952, 0
  %v1003 = vsel %vm230, %v953, 0
  %v1006 = vsel %vm230, %v954, 0
  %v1009 = vsel %vm230, %v955, 0
  %v1012 = vsel %vm230, %v956, 0
  %v1015 = vsel %vm230, %v957, 0
  %1017 = vmatprep.subr.mxu0 0.0
  %1018 = vmatpush1.msra.mxu0 %v958
  %1019 = vmatprep.subr.mxu0 0.0
  %1020 = vmatpush1.msra.mxu0 %v959
  %1021 = vmatprep.subr.mxu0 0.0
  %1022 = vmatpush1.msra.mxu0 %v960
  %1023 = vmatprep.subr.mxu0 0.0
  %1024 = vmatpush1.msra.mxu0 %v961
  %1025 = vmatprep.subr.mxu0 0.0
  %1026 = vmatpush1.msra.mxu0 0.0
  %1027 = vmatprep.subr.mxu0 0.0
  %1028 = vmatpush1.msra.mxu0 0.0
  %1029 = vmatprep.subr.mxu0 0.0
  %1030 = vmatpush1.msra.mxu0 0.0
  %1031 = vmatprep.subr.mxu0 0.0
  %1032 = vmatpush1.msra.mxu0 0.0
  %1033 = vmatprep.subr.mxu0 0.0
  %1034 = vmatpush1.msra.mxu0 0.0
  %1035 = vmatprep.subr.mxu0 0.0
  %1036 = vmatpush1.msra.mxu0 0.0
  %1037 = vmatprep.subr.mxu0 0.0
  %1038 = vmatpush1.msra.mxu0 0.0
  %1039 = vmatprep.subr.mxu0 0.0
  %1040 = vmatpush1.msra.mxu0 0.0
  %1041 = vmatprep.subr.mxu0 0.0
  %1042 = vmatpush1.msra.mxu0 0.0
  %1043 = vmatprep.subr.mxu0 0.0
  %1044 = vmatpush1.msra.mxu0 0.0
  %1045 = vmatprep.subr.mxu0 0.0
  %1046 = vmatpush1.msra.mxu0 0.0
  %1047 = vmatprep.subr.mxu0 0.0
  %1048 = vmatpush1.msra.mxu0 0.0
  %1049 = vmatprep.subr.mxu0 0.0
  %1050 = vmatpush1.msra.mxu0 0.0
  %1051 = vmatprep.subr.mxu0 0.0
  %1052 = vmatpush1.msra.mxu0 0.0
  %1053 = vmatprep.subr.mxu0 0.0
  %1054 = vmatpush1.msra.mxu0 0.0
  %1055 = vmatprep.subr.mxu0 0.0
  %1056 = vmatpush1.msra.mxu0 0.0
  %1057 = vmatprep.subr.mxu0 0.0
  %1058 = vmatpush1.msra.mxu0 0.0
  %1059 = vmatprep.subr.mxu0 0.0
  %1060 = vmatpush1.msra.mxu0 0.0
  %1061 = vmatprep.subr.mxu0 0.0
  %1062 = vmatpush1.msra.mxu0 0.0
  %1063 = vmatprep.subr.mxu0 0.0
  %1064 = vmatpush1.msra.mxu0 0.0
  %1065 = vmatprep.subr.mxu0 0.0
  %1066 = vmatpush1.msra.mxu0 0.0
  %1067 = vmatprep.subr.mxu0 0.0
  %1068 = vmatpush1.msra.mxu0 0.0
  %1069 = vmatprep.subr.mxu0 0.0
  %1070 = vmatpush1.msra.mxu0 0.0
  %1071 = vmatprep.subr.mxu0 0.0
  %1072 = vmatpush1.msra.mxu0 0.0
  %1073 = vmatprep.subr.mxu0 0.0
  %1074 = vmatpush1.msra.mxu0 0.0
  %1075 = vmatprep.subr.mxu0 0.0
  %1076 = vmatpush1.msra.mxu0 0.0
  %1077 = vmatprep.subr.mxu0 0.0
  %1078 = vmatpush1.msra.mxu0 0.0
  %1079 = vmatprep.subr.mxu0 0.0
  %1080 = vmatpush1.msra.mxu0 0.0
  %1081 = vmatprep.mubr.f32.mxu0 0.0
  %1082 = vmatmul.mubr.f32.gmra.mrb[0].mxu0 %v970
  %v1083 = vpop.f32.mrb[0].mxu0
  %v1084 = vadd.f32 %v967, %v1083
  %v1085 = vpop.f32.mrb[0].mxu0
  %1086 = vmatprep.mubr.f32.mxu0 0.0
  %1087 = vmatmul.mubr.f32.gmra.mrb[0].mxu0 %v973
  %v1088 = vpop.f32.mrb[0].mxu0
  %v1089 = vadd.f32 %v967, %v1088
  %v1090 = vpop.f32.mrb[0].mxu0
  %1091 = vmatprep.mubr.f32.mxu0 0.0
  %1092 = vmatmul.mubr.f32.gmra.mrb[0].mxu0 %v976
  %v1093 = vpop.f32.mrb[0].mxu0
  %v1094 = vadd.f32 %v967, %v1093
  %v1095 = vpop.f32.mrb[0].mxu0
  %1096 = vmatprep.mubr.f32.mxu0 0.0
  %1097 = vmatmul.mubr.f32.gmra.mrb[0].mxu0 %v979
  %v1098 = vpop.f32.mrb[0].mxu0
  %v1099 = vadd.f32 %v967, %v1098
  %v1100 = vpop.f32.mrb[0].mxu0
  %1101 = vmatprep.mubr.f32.mxu0 0.0
  %1102 = vmatmul.mubr.f32.gmra.mrb[0].mxu0 %v982
  %v1103 = vpop.f32.mrb[0].mxu0
  %v1104 = vadd.f32 %v967, %v1103
  %v1105 = vpop.f32.mrb[0].mxu0
  %1106 = vmatprep.mubr.f32.mxu0 0.0
  %1107 = vmatmul.mubr.f32.gmra.mrb[0].mxu0 %v985
  %v1108 = vpop.f32.mrb[0].mxu0
  %v1109 = vadd.f32 %v967, %v1108
  %v1110 = vpop.f32.mrb[0].mxu0
  %1111 = vmatprep.mubr.f32.mxu0 0.0
  %1112 = vmatmul.mubr.f32.gmra.mrb[0].mxu0 %v988
  %v1113 = vpop.f32.mrb[0].mxu0
  %v1114 = vadd.f32 %v967, %v1113
  %v1115 = vpop.f32.mrb[0].mxu0
  %1116 = vmatprep.mubr.f32.mxu0 0.0
  %1117 = vmatmul.mubr.f32.gmra.mrb[0].mxu0 %v991
  %v1118 = vpop.f32.mrb[0].mxu0
  %v1119 = vadd.f32 %v967, %v1118
  %v1120 = vpop.f32.mrb[0].mxu0
  %1121 = vmatprep.mubr.f32.mxu0 0.0
  %1122 = vmatmul.mubr.f32.gmra.mrb[0].mxu0 %v994
  %v1123 = vpop.f32.mrb[0].mxu0
  %v1124 = vadd.f32 %v967, %v1123
  %v1125 = vpop.f32.mrb[0].mxu0
  %1126 = vmatprep.mubr.f32.mxu0 0.0
  %1127 = vmatmul.mubr.f32.gmra.mrb[0].mxu0 %v997
  %v1128 = vpop.f32.mrb[0].mxu0
  %v1129 = vadd.f32 %v967, %v1128
  %v1130 = vpop.f32.mrb[0].mxu0
  %1131 = vmatprep.mubr.f32.mxu0 0.0
  %1132 = vmatmul.mubr.f32.gmra.mrb[0].mxu0 %v1000
  %v1133 = vpop.f32.mrb[0].mxu0
  %v1134 = vadd.f32 %v967, %v1133
  %v1135 = vpop.f32.mrb[0].mxu0
  %1136 = vmatprep.mubr.f32.mxu0 0.0
  %1137 = vmatmul.mubr.f32.gmra.mrb[0].mxu0 %v1003
  %v1138 = vpop.f32.mrb[0].mxu0
  %v1139 = vadd.f32 %v967, %v1138
  %v1140 = vpop.f32.mrb[0].mxu0
  %1141 = vmatprep.mubr.f32.mxu0 0.0
  %1142 = vmatmul.mubr.f32.gmra.mrb[0].mxu0 %v1006
  %v1143 = vpop.f32.mrb[0].mxu0
  %v1144 = vadd.f32 %v967, %v1143
  %v1145 = vpop.f32.mrb[0].mxu0
  %1146 = vmatprep.mubr.f32.mxu0 0.0
  %1147 = vmatmul.mubr.f32.gmra.mrb[0].mxu0 %v1009
  %v1148 = vpop.f32.mrb[0].mxu0
  %v1149 = vadd.f32 %v967, %v1148
  %v1150 = vpop.f32.mrb[0].mxu0
  %1151 = vmatprep.mubr.f32.mxu0 0.0
  %1152 = vmatmul.mubr.f32.gmra.mrb[0].mxu0 %v1012
  %v1153 = vpop.f32.mrb[0].mxu0
  %v1154 = vadd.f32 %v967, %v1153
  %v1155 = vpop.f32.mrb[0].mxu0
  %1156 = vmatprep.mubr.f32.mxu0 0.0
  %1157 = vmatmul.mubr.f32.gmra.mrb[0].mxu0 %v1015
  %v1158 = vpop.f32.mrb[0].mxu0
  %v1159 = vadd.f32 %v967, %v1158
  %v1160 = vpop.f32.mrb[0].mxu0
  %1161 = vdwg.mxu0
  %1162 = vst [vmem:[%s10] sm:$0xff] %v1084
  %1163 = vst [vmem:[%s10 + $0x8] sm:$0xff] %v1089
  %1164 = vst [vmem:[%s10 + $0x10] sm:$0xff] %v1094
  %1165 = vst [vmem:[%s10 + $0x18] sm:$0xff] %v1099
  %1166 = vst [vmem:[%s10 + $0x20] sm:$0xff] %v1104
  %1167 = vst [vmem:[%s10 + $0x28] sm:$0xff] %v1109
  %1168 = vst [vmem:[%s10 + $0x30] sm:$0xff] %v1114
  %1169 = vst [vmem:[%s10 + $0x38] sm:$0xff] %v1119
  %1170 = vst [vmem:[%s10 + $0x40] sm:$0xff] %v1124
  %1171 = vst [vmem:[%s10 + $0x48] sm:$0xff] %v1129
  %1172 = vst [vmem:[%s10 + $0x50] sm:$0xff] %v1134
  %1173 = vst [vmem:[%s10 + $0x58] sm:$0xff] %v1139
  %1174 = vst [vmem:[%s10 + $0x60] sm:$0xff] %v1144
  %1175 = vst [vmem:[%s10 + $0x68] sm:$0xff] %v1149
  %1176 = vst [vmem:[%s10 + $0x70] sm:$0xff] %v1154
  %1177 = vst [vmem:[%s10 + $0x78] sm:$0xff] %v1159
  // Predicated region
  $region42: #{cls_decoder_forward.3} parent=0 // pred_check
    _
  $region43: #{cls_decoder_forward.3} parent=0 // pred_check_branch
    %1179 = sbr.rel (0) target = $region45
  $region44: #{cls_decoder_forward.3} parent=0 // pred_region
    _
  $region45: #{cls_decoder_forward.3} parent=0 // pred_fallthru
    _
  // Predicated region
  $region46: #{cls_decoder_forward.3} parent=0 // pred_check
    _
  $region47: #{cls_decoder_forward.3} parent=0 // pred_check_branch
    %1181 = sbr.rel (0) target = $region49
  $region48: #{cls_decoder_forward.3} parent=0 // pred_region
    _
  $region49: #{cls_decoder_forward.3} parent=0 // pred_fallthru
    _

</llo_original>
